<compile_context>
chip_gen: v6e
topology: v6e:2x2x1
jax: 0.10.0
libtpu: 0.0.40
codegen_flags: <defaults>
</compile_context>

<pallas_src>
import functools

import jax
import jax.numpy as jnp
from jax.experimental import pallas as pl
from jax.experimental.pallas import tpu as pltpu

EPS = 1e-5  # PyTorch BatchNorm2d default eps


# ------------------------------ fused kernel ------------------------------- #

def _aspp_fused_kernel(x_ref,                          # (1, C, P) raw input
                       w0t_ref, b0_ref,                # global 1x1, BN folded
                       w1t_ref, b1_ref,                # aspp_1 1x1, BN folded
                       w2t_ref, w3t_ref, w4t_ref,      # dilated, scale folded
                       bmaps_ref,                      # (3, midc, P) bias maps
                       masks_ref,                      # (T, P) tap validity
                       w6t_ref, b6_ref,                # layer6 (outc, 5*midc)
                       o_ref,                          # (1, outc, P)
                       *, P, tap_specs):
    x = x_ref[0]                                       # (C, P), VMEM resident
    C = x.shape[0]

    # ---- aspp_0: global average pool -> (BN folded) 1x1 conv -> ReLU ------ #
    # g is computed directly at width P so it can join the single stacked
    # layer6 matmul (no extra tiny layer6 dot, no slice-and-rebroadcast).
    xm = jnp.mean(x, axis=1, keepdims=True)            # (C, 1)
    g = jnp.maximum(
        jnp.dot(w0t_ref[...], jnp.broadcast_to(xm, (C, P)),
                preferred_element_type=jnp.float32) + b0_ref[...], 0.0)

    # ---- aspp_1: (BN folded) 1x1 conv -> ReLU ------------------------------ #
    y1 = jnp.maximum(
        jnp.dot(w1t_ref[...], x, preferred_element_type=jnp.float32)
        + b1_ref[...], 0.0)

    branch_outs = [g, y1]

    # ---- aspp_2/3/4: dilated 3x3 conv (BN scale in weights) -> ReLU -------- #
    for bi, wt_ref in enumerate((w2t_ref, w3t_ref, w4t_ref)):
        cols = []
        for off, mrow in tap_specs[bi]:
            if off == 0:
                cols.append(x)                                   # center tap
            else:
                tap = pltpu.roll(x, shift=(-off) % P, axis=1)    # XLU rotate
                cols.append(tap * masks_ref[mrow:mrow + 1, :])   # zero pad
        col = cols[0] if len(cols) == 1 else jnp.concatenate(cols, axis=0)
        yb = jnp.maximum(
            jnp.dot(wt_ref[...], col, preferred_element_type=jnp.float32)
            + bmaps_ref[bi], 0.0)                                # (midc, P)
        branch_outs.append(yb)

    # ---- layer6: one (outc, 5*midc) x (5*midc, P) matmul + bias ------------ #
    stacked = jnp.concatenate(branch_outs, axis=0)               # (5*midc, P)
    o_ref[0] = (jnp.dot(w6t_ref[...], stacked,
                        preferred_element_type=jnp.float32) + b6_ref[...])


# --------------------------- parameter preparation ------------------------- #

def _fold_bn_1x1(p):
    """Fold eval BatchNorm into a 1x1 conv: (midc, C) weight, (midc, 1) bias."""
    scale = p["gamma"][0] / jnp.sqrt(p["var"][0] + EPS)          # (C,)
    shift = p["beta"][0] - p["mean"][0] * scale                  # (C,)
    w = p["w"]                                                   # (C, midc)
    wt = (w * scale[:, None]).T                                  # (midc, C)
    b = p["b"][0] + jnp.sum(shift[:, None] * w, axis=0)          # (midc,)
    return wt, b[:, None]


def _prep_dilated(p, d, H, W, midc, mask_base):
    """Dilated branch prep: scale-folded flattened weight, per-position bias
    map (BN shift + conv bias, border exact), tap specs and validity masks."""
    P = H * W
    scale = p["gamma"][0] / jnp.sqrt(p["var"][0] + EPS)          # (C,)
    shift = p["beta"][0] - p["mean"][0] * scale                  # (C,)
    hh = jnp.arange(H)[:, None]
    ww = jnp.arange(W)[None, :]
    w_blocks, specs, masks = [], [], []
    bmap = jnp.zeros((midc, P), jnp.float32) + p["b"][0][:, None]
    for ky in range(3):
        for kx in range(3):
            dy, dx = (ky - 1) * d, (kx - 1) * d
            if abs(dy) >= H or abs(dx) >= W:
                continue                        # tap never touches the image
            valid = ((hh + dy >= 0) & (hh + dy < H) &
                     (ww + dx >= 0) & (ww + dx < W)).reshape(-1)
            valid_f = valid.astype(jnp.float32)                  # (P,)
            w_blocks.append((p["w"][ky, kx] * scale[:, None]).T)  # (midc, C)
            sv = jnp.sum(shift[:, None] * p["w"][ky, kx], axis=0)  # (midc,)
            bmap = bmap + sv[:, None] * valid_f[None, :]
            off = dy * W + dx
            if off == 0:
                specs.append((0, -1))
            else:
                specs.append((off, mask_base + len(masks)))
                masks.append(valid_f)
    wt = jnp.concatenate(w_blocks, axis=1)                       # (midc, nt*C)
    return wt, bmap, tuple(specs), masks


# ------------------------------- forward pass ------------------------------ #

def aspp_v2_forward(x_nchw, params):
    N, C, H, W = x_nchw.shape
    P = H * W
    midc = params["aspp_1"]["w"].shape[1]
    outc = params["layer6"]["w"].shape[1]

    x_cf = x_nchw.reshape(N, C, P)                  # free reshape, NC(HW)

    w0t, b0 = _fold_bn_1x1(params["aspp_0"])
    w1t, b1 = _fold_bn_1x1(params["aspp_1"])

    wts, bmaps, tap_specs, mask_rows = [], [], [], []
    for name, d in (("aspp_2", 6), ("aspp_3", 12), ("aspp_4", 18)):
        wt, bmap, specs, branch_masks = _prep_dilated(
            params[name], d, H, W, midc, len(mask_rows))
        wts.append(wt)
        bmaps.append(bmap)
        tap_specs.append(specs)
        mask_rows.extend(branch_masks)

    bmaps = jnp.stack(bmaps)                        # (3, midc, P)
    masks = (jnp.stack(mask_rows) if mask_rows
             else jnp.ones((1, P), jnp.float32))    # (T, P)

    w6t = params["layer6"]["w"].T                   # (outc, 5*midc)
    b6 = params["layer6"]["b"][0][:, None]          # (outc, 1)

    kernel = functools.partial(_aspp_fused_kernel, P=P,
                               tap_specs=tuple(tap_specs))

    def _const(arr):
        # Constant across the batch grid; block == full array.
        # TODO(synk): at realistic weight sizes mark these Buffered(1).
        return pl.BlockSpec(arr.shape, lambda n, _nd=arr.ndim: (0,) * _nd)

    weight_args = [w0t, b0, w1t, b1, wts[0], wts[1], wts[2],
                   bmaps, masks, w6t, b6]
    in_specs = ([pl.BlockSpec((1, C, P), lambda n: (n, 0, 0))]
                + [_const(a) for a in weight_args])

    out = pl.pallas_call(
        kernel,
        out_shape=jax.ShapeDtypeStruct((N, outc, P), jnp.float32),
        grid_spec=pltpu.PrefetchScalarGridSpec(
            num_scalar_prefetch=0,
            grid=(N,),
            in_specs=in_specs,
            out_specs=pl.BlockSpec((1, outc, P), lambda n: (n, 0, 0)),
        ),
        compiler_params=pltpu.CompilerParams(
            dimension_semantics=("parallel",)),
    )(x_cf, *weight_args)

    return out.reshape(N, outc, H, W)               # already NCHW, free reshape


# ----------------------- deterministic parameter init ---------------------- #

def init_params(key, inc, midc, outc):
    def bn_p(k):
        k1, k2, k3, k4 = jax.random.split(k, 4)
        return dict(
            gamma=jax.random.uniform(k1, (1, inc), jnp.float32, 0.5, 1.5),
            beta=0.1 * jax.random.normal(k2, (1, inc), jnp.float32),
            mean=0.1 * jax.random.normal(k3, (1, inc), jnp.float32),
            var=jax.random.uniform(k4, (1, inc), jnp.float32, 0.5, 1.5),
        )

    keys = jax.random.split(key, 12)
    params = {}
    for i, name in enumerate(["aspp_0", "aspp_1"]):
        p = bn_p(keys[2 * i])
        kw, kb = jax.random.split(keys[2 * i + 1])
        p["w"] = 0.1 * jax.random.normal(kw, (inc, midc), jnp.float32)
        p["b"] = 0.1 * jax.random.normal(kb, (1, midc), jnp.float32)
        params[name] = p
    for i, name in enumerate(["aspp_2", "aspp_3", "aspp_4"]):
        p = bn_p(keys[4 + 2 * i])
        kw, kb = jax.random.split(keys[5 + 2 * i])
        p["w"] = 0.1 * jax.random.normal(kw, (3, 3, inc, midc), jnp.float32)
        p["b"] = 0.1 * jax.random.normal(kb, (1, midc), jnp.float32)
        params[name] = p
    kw, kb = jax.random.split(keys[10])
    params["layer6"] = dict(
        w=0.1 * jax.random.normal(kw, (5 * midc, outc), jnp.float32),
        b=0.1 * jax.random.normal(kb, (1, outc), jnp.float32),
    )
    return params


# ------------------------------ pure-JAX reference ------------------------- #

def reference_forward(x, params):
    def bn(x_, p):
        s = p["gamma"][0] / jnp.sqrt(p["var"][0] + EPS)
        sh = p["beta"][0] - p["mean"][0] * s
        return x_ * s[None, :, None, None] + sh[None, :, None, None]

    def conv(x_, w_hwio, b, dil, pad):
        y = jax.lax.conv_general_dilated(
            x_, w_hwio, window_strides=(1, 1),
            padding=[(pad, pad), (pad, pad)], rhs_dilation=(dil, dil),
            dimension_numbers=("NCHW", "HWIO", "NCHW"),
            precision=jax.lax.Precision.HIGHEST)
        return y + b[0][None, :, None, None]

    N, C, H, W = x.shape
    p0 = params["aspp_0"]
    gfeat = jnp.mean(x, axis=(2, 3), keepdims=True)
    gfeat = jax.nn.relu(conv(bn(gfeat, p0), p0["w"][None, None], p0["b"], 1, 0))
    gfeat = jnp.broadcast_to(gfeat, (N, gfeat.shape[1], H, W))
    p1 = params["aspp_1"]
    y1 = jax.nn.relu(conv(bn(x, p1), p1["w"][None, None], p1["b"], 1, 0))
    outs = [gfeat, y1]
    for name, dil in (("aspp_2", 6), ("aspp_3", 12), ("aspp_4", 18)):
        pp = params[name]
        outs.append(jax.nn.relu(conv(bn(x, pp), pp["w"], pp["b"], dil, dil)))
    cat = jnp.concatenate(outs, axis=1)
    p6 = params["layer6"]
    return conv(cat, p6["w"][None, None], p6["b"], 1, 0)


# ----------------------------------- main ----------------------------------- #

if __name__ == "__main__":
    N, inc, midc, outc, H, W = 2, 8, 8, 16, 16, 16
    key = jax.random.PRNGKey(0)
    kx, kp = jax.random.split(key)
    x = jax.random.normal(kx, (N, inc, H, W), jnp.float32)   # NCHW like PyTorch
    params = init_params(kp, inc, midc, outc)

    out = jax.block_until_ready(aspp_v2_forward(x, params))
    ref = jax.block_until_ready(reference_forward(x, params))

    assert out.shape == (N, outc, H, W), out.shape
    # BN folding is exact and all math is f32, so the kernel matches the
    # (precision=HIGHEST) reference to ~1e-5; 1e-3 leaves comfortable margin.
    err = float(jnp.max(jnp.abs(out - ref)))
    assert jnp.allclose(out, ref, atol=1e-3, rtol=1e-3), err
    print("KERNEL_OK")
</pallas_src>

<mosaic_0001>
module attributes {stable_mosaic.version = 11 : i64} {
  func.func @_aspp_fused_kernel(%arg0: i32, %arg1: memref<1x8x256xf32, #tpu.memory_space<vmem>>, %arg2: memref<8x8xf32, #tpu.memory_space<vmem>>, %arg3: memref<8x1xf32, #tpu.memory_space<vmem>>, %arg4: memref<8x8xf32, #tpu.memory_space<vmem>>, %arg5: memref<8x1xf32, #tpu.memory_space<vmem>>, %arg6: memref<8x72xf32, #tpu.memory_space<vmem>>, %arg7: memref<8x72xf32, #tpu.memory_space<vmem>>, %arg8: memref<8x8xf32, #tpu.memory_space<vmem>>, %arg9: memref<3x8x256xf32, #tpu.memory_space<vmem>>, %arg10: memref<16x256xf32, #tpu.memory_space<vmem>>, %arg11: memref<16x40xf32, #tpu.memory_space<vmem>>, %arg12: memref<16x1xf32, #tpu.memory_space<vmem>>, %arg13: memref<1x16x256xf32, #tpu.memory_space<vmem>>) attributes {dimension_semantics = [#tpu.dimension_semantics<parallel>], iteration_bounds = array<i64: 2>, scalar_prefetch = 0 : i64, scratch_operands = 0 : i64, tpu.core_type = #tpu.core_type<tc>, window_params = [{transform_indices = @transform_0, window_bounds = array<i64: 1, 8, 256>}, {pipeline_mode = #tpu.pipeline_mode<synchronous>, transform_indices = @transform_1, window_bounds = array<i64: 8, 8>}, {pipeline_mode = #tpu.pipeline_mode<synchronous>, transform_indices = @transform_2, window_bounds = array<i64: 8, 1>}, {pipeline_mode = #tpu.pipeline_mode<synchronous>, transform_indices = @transform_3, window_bounds = array<i64: 8, 8>}, {pipeline_mode = #tpu.pipeline_mode<synchronous>, transform_indices = @transform_4, window_bounds = array<i64: 8, 1>}, {pipeline_mode = #tpu.pipeline_mode<synchronous>, transform_indices = @transform_5, window_bounds = array<i64: 8, 72>}, {pipeline_mode = #tpu.pipeline_mode<synchronous>, transform_indices = @transform_6, window_bounds = array<i64: 8, 72>}, {pipeline_mode = #tpu.pipeline_mode<synchronous>, transform_indices = @transform_7, window_bounds = array<i64: 8, 8>}, {pipeline_mode = #tpu.pipeline_mode<synchronous>, transform_indices = @transform_8, window_bounds = array<i64: 3, 8, 256>}, {pipeline_mode = #tpu.pipeline_mode<synchronous>, transform_indices = @transform_9, window_bounds = array<i64: 16, 256>}, {pipeline_mode = #tpu.pipeline_mode<synchronous>, transform_indices = @transform_10, window_bounds = array<i64: 16, 40>}, {pipeline_mode = #tpu.pipeline_mode<synchronous>, transform_indices = @transform_11, window_bounds = array<i64: 16, 1>}, {transform_indices = @transform_12, window_bounds = array<i64: 1, 16, 256>}]} {
    %c0 = arith.constant 0 : index
    %c0_0 = arith.constant 0 : index
    %c0_1 = arith.constant 0 : index
    %0 = vector.load %arg1[%c0, %c0_0, %c0_1] : memref<1x8x256xf32, #tpu.memory_space<vmem>>, vector<1x8x256xf32>
    %1 = vector.shape_cast %0 : vector<1x8x256xf32> to vector<8x256xf32>
    %cst = arith.constant dense<0.000000e+00> : vector<8xf32>
    %2 = vector.multi_reduction <add>, %1, %cst [1] : vector<8x256xf32> to vector<8xf32>
    %3 = vector.shape_cast %2 : vector<8xf32> to vector<8x1xf32>
    %cst_2 = arith.constant 2.560000e+02 : f32
    %4 = vector.broadcast %cst_2 : f32 to vector<8x1xf32>
    %5 = arith.divf %3, %4 : vector<8x1xf32>
    %c0_3 = arith.constant 0 : index
    %c0_4 = arith.constant 0 : index
    %6 = vector.load %arg2[%c0_3, %c0_4] : memref<8x8xf32, #tpu.memory_space<vmem>>, vector<8x8xf32>
    %7 = vector.shape_cast %5 : vector<8x1xf32> to vector<8x1xf32>
    %8 = vector.broadcast %7 : vector<8x1xf32> to vector<8x256xf32>
    %cst_5 = arith.constant dense<0.000000e+00> : vector<8x256xf32>
    %9 = tpu.matmul %6, %8, %cst_5 {dimension_numbers = #tpu.dot_dimension_numbers<[1], [0], [0], [1], [0, 0, 1, 1], [], []>} : vector<8x8xf32>, vector<8x256xf32>, vector<8x256xf32> -> vector<8x256xf32>
    %c0_6 = arith.constant 0 : index
    %c0_7 = arith.constant 0 : index
    %10 = vector.load %arg3[%c0_6, %c0_7] : memref<8x1xf32, #tpu.memory_space<vmem>>, vector<8x1xf32>
    %11 = vector.broadcast %10 : vector<8x1xf32> to vector<8x256xf32>
    %12 = arith.addf %9, %11 : vector<8x256xf32>
    %cst_8 = arith.constant 0.000000e+00 : f32
    %13 = vector.broadcast %cst_8 : f32 to vector<8x256xf32>
    %14 = arith.maximumf %12, %13 : vector<8x256xf32>
    %c0_9 = arith.constant 0 : index
    %c0_10 = arith.constant 0 : index
    %15 = vector.load %arg4[%c0_9, %c0_10] : memref<8x8xf32, #tpu.memory_space<vmem>>, vector<8x8xf32>
    %cst_11 = arith.constant dense<0.000000e+00> : vector<8x256xf32>
    %16 = tpu.matmul %15, %1, %cst_11 {dimension_numbers = #tpu.dot_dimension_numbers<[1], [0], [0], [1], [0, 0, 1, 1], [], []>} : vector<8x8xf32>, vector<8x256xf32>, vector<8x256xf32> -> vector<8x256xf32>
    %c0_12 = arith.constant 0 : index
    %c0_13 = arith.constant 0 : index
    %17 = vector.load %arg5[%c0_12, %c0_13] : memref<8x1xf32, #tpu.memory_space<vmem>>, vector<8x1xf32>
    %18 = vector.broadcast %17 : vector<8x1xf32> to vector<8x256xf32>
    %19 = arith.addf %16, %18 : vector<8x256xf32>
    %cst_14 = arith.constant 0.000000e+00 : f32
    %20 = vector.broadcast %cst_14 : f32 to vector<8x256xf32>
    %21 = arith.maximumf %19, %20 : vector<8x256xf32>
    %c102_i32 = arith.constant 102 : i32
    %22 = tpu.dynamic_rotate %1 by %c102_i32 dim 1 : vector<8x256xf32>, i32 -> vector<8x256xf32>
    %c0_15 = arith.constant 0 : index
    %c0_16 = arith.constant 0 : index
    %23 = vector.load %arg10[%c0_15, %c0_16] : memref<16x256xf32, #tpu.memory_space<vmem>>, vector<1x256xf32>
    %24 = vector.broadcast %23 : vector<1x256xf32> to vector<8x256xf32>
    %25 = arith.mulf %22, %24 : vector<8x256xf32>
    %c96_i32 = arith.constant 96 : i32
    %26 = tpu.dynamic_rotate %1 by %c96_i32 dim 1 : vector<8x256xf32>, i32 -> vector<8x256xf32>
    %c1 = arith.constant 1 : index
    %c0_17 = arith.constant 0 : index
    %27 = vector.load %arg10[%c1, %c0_17] : memref<16x256xf32, #tpu.memory_space<vmem>>, vector<1x256xf32>
    %28 = vector.broadcast %27 : vector<1x256xf32> to vector<8x256xf32>
    %29 = arith.mulf %26, %28 : vector<8x256xf32>
    %c90_i32 = arith.constant 90 : i32
    %30 = tpu.dynamic_rotate %1 by %c90_i32 dim 1 : vector<8x256xf32>, i32 -> vector<8x256xf32>
    %c2 = arith.constant 2 : index
    %c0_18 = arith.constant 0 : index
    %31 = vector.load %arg10[%c2, %c0_18] : memref<16x256xf32, #tpu.memory_space<vmem>>, vector<1x256xf32>
    %32 = vector.broadcast %31 : vector<1x256xf32> to vector<8x256xf32>
    %33 = arith.mulf %30, %32 : vector<8x256xf32>
    %c6_i32 = arith.constant 6 : i32
    %34 = tpu.dynamic_rotate %1 by %c6_i32 dim 1 : vector<8x256xf32>, i32 -> vector<8x256xf32>
    %c3 = arith.constant 3 : index
    %c0_19 = arith.constant 0 : index
    %35 = vector.load %arg10[%c3, %c0_19] : memref<16x256xf32, #tpu.memory_space<vmem>>, vector<1x256xf32>
    %36 = vector.broadcast %35 : vector<1x256xf32> to vector<8x256xf32>
    %37 = arith.mulf %34, %36 : vector<8x256xf32>
    %c250_i32 = arith.constant 250 : i32
    %38 = tpu.dynamic_rotate %1 by %c250_i32 dim 1 : vector<8x256xf32>, i32 -> vector<8x256xf32>
    %c4 = arith.constant 4 : index
    %c0_20 = arith.constant 0 : index
    %39 = vector.load %arg10[%c4, %c0_20] : memref<16x256xf32, #tpu.memory_space<vmem>>, vector<1x256xf32>
    %40 = vector.broadcast %39 : vector<1x256xf32> to vector<8x256xf32>
    %41 = arith.mulf %38, %40 : vector<8x256xf32>
    %c166_i32 = arith.constant 166 : i32
    %42 = tpu.dynamic_rotate %1 by %c166_i32 dim 1 : vector<8x256xf32>, i32 -> vector<8x256xf32>
    %c5 = arith.constant 5 : index
    %c0_21 = arith.constant 0 : index
    %43 = vector.load %arg10[%c5, %c0_21] : memref<16x256xf32, #tpu.memory_space<vmem>>, vector<1x256xf32>
    %44 = vector.broadcast %43 : vector<1x256xf32> to vector<8x256xf32>
    %45 = arith.mulf %42, %44 : vector<8x256xf32>
    %c160_i32 = arith.constant 160 : i32
    %46 = tpu.dynamic_rotate %1 by %c160_i32 dim 1 : vector<8x256xf32>, i32 -> vector<8x256xf32>
    %c6 = arith.constant 6 : index
    %c0_22 = arith.constant 0 : index
    %47 = vector.load %arg10[%c6, %c0_22] : memref<16x256xf32, #tpu.memory_space<vmem>>, vector<1x256xf32>
    %48 = vector.broadcast %47 : vector<1x256xf32> to vector<8x256xf32>
    %49 = arith.mulf %46, %48 : vector<8x256xf32>
    %c154_i32 = arith.constant 154 : i32
    %50 = tpu.dynamic_rotate %1 by %c154_i32 dim 1 : vector<8x256xf32>, i32 -> vector<8x256xf32>
    %c7 = arith.constant 7 : index
    %c0_23 = arith.constant 0 : index
    %51 = vector.load %arg10[%c7, %c0_23] : memref<16x256xf32, #tpu.memory_space<vmem>>, vector<1x256xf32>
    %52 = vector.broadcast %51 : vector<1x256xf32> to vector<8x256xf32>
    %53 = arith.mulf %50, %52 : vector<8x256xf32>
    %54 = tpu.concatenate %25, %29, %33, %37, %1, %41, %45, %49, %53 in 0 : vector<8x256xf32>, vector<8x256xf32>, vector<8x256xf32>, vector<8x256xf32>, vector<8x256xf32>, vector<8x256xf32>, vector<8x256xf32>, vector<8x256xf32>, vector<8x256xf32> -> vector<72x256xf32>
    %c0_24 = arith.constant 0 : index
    %c0_25 = arith.constant 0 : index
    %55 = vector.load %arg6[%c0_24, %c0_25] : memref<8x72xf32, #tpu.memory_space<vmem>>, vector<8x72xf32>
    %cst_26 = arith.constant dense<0.000000e+00> : vector<8x256xf32>
    %56 = tpu.matmul %55, %54, %cst_26 {dimension_numbers = #tpu.dot_dimension_numbers<[1], [0], [0], [1], [0, 0, 1, 1], [], []>} : vector<8x72xf32>, vector<72x256xf32>, vector<8x256xf32> -> vector<8x256xf32>
    %c0_27 = arith.constant 0 : index
    %c0_28 = arith.constant 0 : index
    %c0_29 = arith.constant 0 : index
    %57 = vector.load %arg9[%c0_27, %c0_28, %c0_29] : memref<3x8x256xf32, #tpu.memory_space<vmem>>, vector<1x8x256xf32>
    %58 = vector.shape_cast %57 : vector<1x8x256xf32> to vector<8x256xf32>
    %59 = arith.addf %56, %58 : vector<8x256xf32>
    %cst_30 = arith.constant 0.000000e+00 : f32
    %60 = vector.broadcast %cst_30 : f32 to vector<8x256xf32>
    %61 = arith.maximumf %59, %60 : vector<8x256xf32>
    %c204_i32 = arith.constant 204 : i32
    %62 = tpu.dynamic_rotate %1 by %c204_i32 dim 1 : vector<8x256xf32>, i32 -> vector<8x256xf32>
    %c8 = arith.constant 8 : index
    %c0_31 = arith.constant 0 : index
    %63 = vector.load %arg10[%c8, %c0_31] : memref<16x256xf32, #tpu.memory_space<vmem>>, vector<1x256xf32>
    %64 = vector.broadcast %63 : vector<1x256xf32> to vector<8x256xf32>
    %65 = arith.mulf %62, %64 : vector<8x256xf32>
    %c192_i32 = arith.constant 192 : i32
    %66 = tpu.dynamic_rotate %1 by %c192_i32 dim 1 : vector<8x256xf32>, i32 -> vector<8x256xf32>
    %c9 = arith.constant 9 : index
    %c0_32 = arith.constant 0 : index
    %67 = vector.load %arg10[%c9, %c0_32] : memref<16x256xf32, #tpu.memory_space<vmem>>, vector<1x256xf32>
    %68 = vector.broadcast %67 : vector<1x256xf32> to vector<8x256xf32>
    %69 = arith.mulf %66, %68 : vector<8x256xf32>
    %c180_i32 = arith.constant 180 : i32
    %70 = tpu.dynamic_rotate %1 by %c180_i32 dim 1 : vector<8x256xf32>, i32 -> vector<8x256xf32>
    %c10 = arith.constant 10 : index
    %c0_33 = arith.constant 0 : index
    %71 = vector.load %arg10[%c10, %c0_33] : memref<16x256xf32, #tpu.memory_space<vmem>>, vector<1x256xf32>
    %72 = vector.broadcast %71 : vector<1x256xf32> to vector<8x256xf32>
    %73 = arith.mulf %70, %72 : vector<8x256xf32>
    %c12_i32 = arith.constant 12 : i32
    %74 = tpu.dynamic_rotate %1 by %c12_i32 dim 1 : vector<8x256xf32>, i32 -> vector<8x256xf32>
    %c11 = arith.constant 11 : index
    %c0_34 = arith.constant 0 : index
    %75 = vector.load %arg10[%c11, %c0_34] : memref<16x256xf32, #tpu.memory_space<vmem>>, vector<1x256xf32>
    %76 = vector.broadcast %75 : vector<1x256xf32> to vector<8x256xf32>
    %77 = arith.mulf %74, %76 : vector<8x256xf32>
    %c244_i32 = arith.constant 244 : i32
    %78 = tpu.dynamic_rotate %1 by %c244_i32 dim 1 : vector<8x256xf32>, i32 -> vector<8x256xf32>
    %c12 = arith.constant 12 : index
    %c0_35 = arith.constant 0 : index
    %79 = vector.load %arg10[%c12, %c0_35] : memref<16x256xf32, #tpu.memory_space<vmem>>, vector<1x256xf32>
    %80 = vector.broadcast %79 : vector<1x256xf32> to vector<8x256xf32>
    %81 = arith.mulf %78, %80 : vector<8x256xf32>
    %c76_i32 = arith.constant 76 : i32
    %82 = tpu.dynamic_rotate %1 by %c76_i32 dim 1 : vector<8x256xf32>, i32 -> vector<8x256xf32>
    %c13 = arith.constant 13 : index
    %c0_36 = arith.constant 0 : index
    %83 = vector.load %arg10[%c13, %c0_36] : memref<16x256xf32, #tpu.memory_space<vmem>>, vector<1x256xf32>
    %84 = vector.broadcast %83 : vector<1x256xf32> to vector<8x256xf32>
    %85 = arith.mulf %82, %84 : vector<8x256xf32>
    %c64_i32 = arith.constant 64 : i32
    %86 = tpu.dynamic_rotate %1 by %c64_i32 dim 1 : vector<8x256xf32>, i32 -> vector<8x256xf32>
    %c14 = arith.constant 14 : index
    %c0_37 = arith.constant 0 : index
    %87 = vector.load %arg10[%c14, %c0_37] : memref<16x256xf32, #tpu.memory_space<vmem>>, vector<1x256xf32>
    %88 = vector.broadcast %87 : vector<1x256xf32> to vector<8x256xf32>
    %89 = arith.mulf %86, %88 : vector<8x256xf32>
    %c52_i32 = arith.constant 52 : i32
    %90 = tpu.dynamic_rotate %1 by %c52_i32 dim 1 : vector<8x256xf32>, i32 -> vector<8x256xf32>
    %c15 = arith.constant 15 : index
    %c0_38 = arith.constant 0 : index
    %91 = vector.load %arg10[%c15, %c0_38] : memref<16x256xf32, #tpu.memory_space<vmem>>, vector<1x256xf32>
    %92 = vector.broadcast %91 : vector<1x256xf32> to vector<8x256xf32>
    %93 = arith.mulf %90, %92 : vector<8x256xf32>
    %94 = tpu.concatenate %65, %69, %73, %77, %1, %81, %85, %89, %93 in 0 : vector<8x256xf32>, vector<8x256xf32>, vector<8x256xf32>, vector<8x256xf32>, vector<8x256xf32>, vector<8x256xf32>, vector<8x256xf32>, vector<8x256xf32>, vector<8x256xf32> -> vector<72x256xf32>
    %c0_39 = arith.constant 0 : index
    %c0_40 = arith.constant 0 : index
    %95 = vector.load %arg7[%c0_39, %c0_40] : memref<8x72xf32, #tpu.memory_space<vmem>>, vector<8x72xf32>
    %cst_41 = arith.constant dense<0.000000e+00> : vector<8x256xf32>
    %96 = tpu.matmul %95, %94, %cst_41 {dimension_numbers = #tpu.dot_dimension_numbers<[1], [0], [0], [1], [0, 0, 1, 1], [], []>} : vector<8x72xf32>, vector<72x256xf32>, vector<8x256xf32> -> vector<8x256xf32>
    %c1_42 = arith.constant 1 : index
    %c0_43 = arith.constant 0 : index
    %c0_44 = arith.constant 0 : index
    %97 = vector.load %arg9[%c1_42, %c0_43, %c0_44] : memref<3x8x256xf32, #tpu.memory_space<vmem>>, vector<1x8x256xf32>
    %98 = vector.shape_cast %97 : vector<1x8x256xf32> to vector<8x256xf32>
    %99 = arith.addf %96, %98 : vector<8x256xf32>
    %cst_45 = arith.constant 0.000000e+00 : f32
    %100 = vector.broadcast %cst_45 : f32 to vector<8x256xf32>
    %101 = arith.maximumf %99, %100 : vector<8x256xf32>
    %c0_46 = arith.constant 0 : index
    %c0_47 = arith.constant 0 : index
    %102 = vector.load %arg8[%c0_46, %c0_47] : memref<8x8xf32, #tpu.memory_space<vmem>>, vector<8x8xf32>
    %cst_48 = arith.constant dense<0.000000e+00> : vector<8x256xf32>
    %103 = tpu.matmul %102, %1, %cst_48 {dimension_numbers = #tpu.dot_dimension_numbers<[1], [0], [0], [1], [0, 0, 1, 1], [], []>} : vector<8x8xf32>, vector<8x256xf32>, vector<8x256xf32> -> vector<8x256xf32>
    %c2_49 = arith.constant 2 : index
    %c0_50 = arith.constant 0 : index
    %c0_51 = arith.constant 0 : index
    %104 = vector.load %arg9[%c2_49, %c0_50, %c0_51] : memref<3x8x256xf32, #tpu.memory_space<vmem>>, vector<1x8x256xf32>
    %105 = vector.shape_cast %104 : vector<1x8x256xf32> to vector<8x256xf32>
    %106 = arith.addf %103, %105 : vector<8x256xf32>
    %cst_52 = arith.constant 0.000000e+00 : f32
    %107 = vector.broadcast %cst_52 : f32 to vector<8x256xf32>
    %108 = arith.maximumf %106, %107 : vector<8x256xf32>
    %109 = tpu.concatenate %14, %21, %61, %101, %108 in 0 : vector<8x256xf32>, vector<8x256xf32>, vector<8x256xf32>, vector<8x256xf32>, vector<8x256xf32> -> vector<40x256xf32>
    %c0_53 = arith.constant 0 : index
    %c0_54 = arith.constant 0 : index
    %110 = vector.load %arg11[%c0_53, %c0_54] : memref<16x40xf32, #tpu.memory_space<vmem>>, vector<16x40xf32>
    %cst_55 = arith.constant dense<0.000000e+00> : vector<16x256xf32>
    %111 = tpu.matmul %110, %109, %cst_55 {dimension_numbers = #tpu.dot_dimension_numbers<[1], [0], [0], [1], [0, 0, 1, 1], [], []>} : vector<16x40xf32>, vector<40x256xf32>, vector<16x256xf32> -> vector<16x256xf32>
    %c0_56 = arith.constant 0 : index
    %c0_57 = arith.constant 0 : index
    %112 = vector.load %arg12[%c0_56, %c0_57] : memref<16x1xf32, #tpu.memory_space<vmem>>, vector<16x1xf32>
    %113 = vector.broadcast %112 : vector<16x1xf32> to vector<16x256xf32>
    %114 = arith.addf %111, %113 : vector<16x256xf32>
    %c0_58 = arith.constant 0 : index
    %c0_59 = arith.constant 0 : index
    %c0_60 = arith.constant 0 : index
    %115 = vector.load %arg13[%c0_58, %c0_59, %c0_60] : memref<1x16x256xf32, #tpu.memory_space<vmem>>, vector<1x16x256xf32>
    %116 = vector.shape_cast %115 : vector<1x16x256xf32> to vector<16x256xf32>
    %117 = vector.shape_cast %114 : vector<16x256xf32> to vector<1x16x256xf32>
    tpu.vector_store %arg13[%c0_58, %c0_59, %c0_60], %117 {strides = array<i32>} : memref<1x16x256xf32, #tpu.memory_space<vmem>>, vector<1x16x256xf32>,
    return
  }
  func.func @transform_0(%arg0: i32) -> (i32, i32, i32) {
    %c0_i32 = arith.constant 0 : i32
    %c0_i32_0 = arith.constant 0 : i32
    %c0_i32_1 = arith.constant 0 : i32
    return %arg0, %c0_i32, %c0_i32_0 : i32, i32, i32
  }
  func.func @transform_1(%arg0: i32) -> (i32, i32) {
    %c0_i32 = arith.constant 0 : i32
    %c0_i32_0 = arith.constant 0 : i32
    %c0_i32_1 = arith.constant 0 : i32
    return %c0_i32, %c0_i32_0 : i32, i32
  }
  func.func @transform_2(%arg0: i32) -> (i32, i32) {
    %c0_i32 = arith.constant 0 : i32
    %c0_i32_0 = arith.constant 0 : i32
    %c0_i32_1 = arith.constant 0 : i32
    return %c0_i32, %c0_i32_0 : i32, i32
  }
  func.func @transform_3(%arg0: i32) -> (i32, i32) {
    %c0_i32 = arith.constant 0 : i32
    %c0_i32_0 = arith.constant 0 : i32
    %c0_i32_1 = arith.constant 0 : i32
    return %c0_i32, %c0_i32_0 : i32, i32
  }
  func.func @transform_4(%arg0: i32) -> (i32, i32) {
    %c0_i32 = arith.constant 0 : i32
    %c0_i32_0 = arith.constant 0 : i32
    %c0_i32_1 = arith.constant 0 : i32
    return %c0_i32, %c0_i32_0 : i32, i32
  }
  func.func @transform_5(%arg0: i32) -> (i32, i32) {
    %c0_i32 = arith.constant 0 : i32
    %c0_i32_0 = arith.constant 0 : i32
    %c0_i32_1 = arith.constant 0 : i32
    return %c0_i32, %c0_i32_0 : i32, i32
  }
  func.func @transform_6(%arg0: i32) -> (i32, i32) {
    %c0_i32 = arith.constant 0 : i32
    %c0_i32_0 = arith.constant 0 : i32
    %c0_i32_1 = arith.constant 0 : i32
    return %c0_i32, %c0_i32_0 : i32, i32
  }
  func.func @transform_7(%arg0: i32) -> (i32, i32) {
    %c0_i32 = arith.constant 0 : i32
    %c0_i32_0 = arith.constant 0 : i32
    %c0_i32_1 = arith.constant 0 : i32
    return %c0_i32, %c0_i32_0 : i32, i32
  }
  func.func @transform_8(%arg0: i32) -> (i32, i32, i32) {
    %c0_i32 = arith.constant 0 : i32
    %c0_i32_0 = arith.constant 0 : i32
    %c0_i32_1 = arith.constant 0 : i32
    %c0_i32_2 = arith.constant 0 : i32
    return %c0_i32, %c0_i32_0, %c0_i32_1 : i32, i32, i32
  }
  func.func @transform_9(%arg0: i32) -> (i32, i32) {
    %c0_i32 = arith.constant 0 : i32
    %c0_i32_0 = arith.constant 0 : i32
    %c0_i32_1 = arith.constant 0 : i32
    return %c0_i32, %c0_i32_0 : i32, i32
  }
  func.func @transform_10(%arg0: i32) -> (i32, i32) {
    %c0_i32 = arith.constant 0 : i32
    %c0_i32_0 = arith.constant 0 : i32
    %c0_i32_1 = arith.constant 0 : i32
    return %c0_i32, %c0_i32_0 : i32, i32
  }
  func.func @transform_11(%arg0: i32) -> (i32, i32) {
    %c0_i32 = arith.constant 0 : i32
    %c0_i32_0 = arith.constant 0 : i32
    %c0_i32_1 = arith.constant 0 : i32
    return %c0_i32, %c0_i32_0 : i32, i32
  }
  func.func @transform_12(%arg0: i32) -> (i32, i32, i32) {
    %c0_i32 = arith.constant 0 : i32
    %c0_i32_0 = arith.constant 0 : i32
    %c0_i32_1 = arith.constant 0 : i32
    return %arg0, %c0_i32, %c0_i32_0 : i32, i32, i32
  }
}

</mosaic_0001>

<llo_original>
// kernel: tpu_custom_call.1
$region0: #{tpu_custom_call.1}
  #allocation0 [shape = 'u32[]', space=smem, size = 0x4, offset = 0x4, fixed_abs, tag = 'smem constant byte address 0x4 - core index']
  #allocation1 [shape = 'u32[144,128]{1,0:T(1,128)}', space=vmem, size = 0x12000, scoped, tag = 'internal scratch']
  %s0 = inlined_call_operand.hbm [shape: f32[2,8,256], index: 0, kind: input, shape index: {}]
  %s1 = inlined_call_operand.hbm [shape: f32[8,8], index: 1, kind: input, shape index: {}]
  %s2 = inlined_call_operand.vmem [shape: f32[8,1], index: 2, kind: input, shape index: {}]
  %s3 = inlined_call_operand.hbm [shape: f32[8,8], index: 3, kind: input, shape index: {}]
  %s4 = inlined_call_operand.vmem [shape: f32[8,1], index: 4, kind: input, shape index: {}]
  %s5 = inlined_call_operand.hbm [shape: f32[8,72], index: 5, kind: input, shape index: {}]
  %s6 = inlined_call_operand.hbm [shape: f32[8,72], index: 6, kind: input, shape index: {}]
  %s7 = inlined_call_operand.hbm [shape: f32[8,8], index: 7, kind: input, shape index: {}]
  %s8 = inlined_call_operand.vmem [shape: f32[3,8,256], index: 8, kind: input, shape index: {}]
  %s9 = inlined_call_operand.hbm [shape: f32[16,256], index: 9, kind: input, shape index: {}]
  %s10 = inlined_call_operand.hbm [shape: f32[16,40], index: 10, kind: input, shape index: {}]
  %s11 = inlined_call_operand.vmem [shape: f32[16,1], index: 11, kind: input, shape index: {}]
  %s12 = inlined_call_operand.hbm [shape: f32[2,16,256], index: 12, kind: output, shape index: {}]
  %s13 = sld [smem:[#allocation0]]
  $region113: #{tpu_custom_call.1} parent=0
    _
  %s15 = ssub.s32 1, %s13
  %s16 = scalar_select 0, %s15, %s13
  $region1: #{tpu_custom_call.1} parent=0
    #allocation2 [shape = 'u8[16384]{0}', space=vmem, size = 0x4000, scoped, tag = 'input window, operand 0']
    #allocation3 [shape = 's32[2]{0}', space=sflag, size = 0x8, scoped, tag = 'scoped memory for tpu_custom_call.1']
    #allocation4 [shape = 's32[2]{0}', space=sflag, size = 0x8, scoped, tag = 'scoped memory for tpu_custom_call.1']
    #allocation5 [shape = 'u8[4096]{0}', space=vmem, size = 0x1000, scoped, tag = 'input window, operand 1, single buffered']
    #allocation6 [shape = 's32[1]{0}', space=sflag, size = 0x4, scoped, tag = 'scoped memory for tpu_custom_call.1']
    #allocation7 [shape = 'u8[4096]{0}', space=vmem, size = 0x1000, scoped, tag = 'input window, operand 3, single buffered']
    #allocation8 [shape = 'u8[4096]{0}', space=vmem, size = 0x1000, scoped, tag = 'input window, operand 5, single buffered']
    #allocation9 [shape = 's32[1]{0}', space=sflag, size = 0x4, scoped, tag = 'scoped memory for tpu_custom_call.1']
    #allocation10 [shape = 'u8[4096]{0}', space=vmem, size = 0x1000, scoped, tag = 'input window, operand 6, single buffered']
    #allocation11 [shape = 'u8[4096]{0}', space=vmem, size = 0x1000, scoped, tag = 'input window, operand 7, single buffered']
    #allocation12 [shape = 's32[1]{0}', space=sflag, size = 0x4, scoped, tag = 'scoped memory for tpu_custom_call.1']
    #allocation13 [shape = 'u8[16384]{0}', space=vmem, size = 0x4000, scoped, tag = 'input window, operand 9, single buffered']
    #allocation14 [shape = 'u8[8192]{0}', space=vmem, size = 0x2000, scoped, tag = 'input window, operand 10, single buffered']
    #allocation15 [shape = 's32[1]{0}', space=sflag, size = 0x4, scoped, tag = 'scoped memory for tpu_custom_call.1']
    #allocation16 [shape = 'u8[32768]{0}', space=vmem, size = 0x8000, scoped, tag = 'output window, operand 0']
    %17 = vsyncpa [#allocation3], 0
    %s18 = scalar_lea.sflag [#allocation3], 1
    %19 = vsyncpa %s18, 0
    %20 = vsyncpa [#allocation6], 0
    %21 = vsyncpa [#allocation9], 0
    %22 = vsyncpa [#allocation12], 0
    %23 = vsyncpa [#allocation15], 0
    %24 = vsyncpa [#allocation4], 0
    %s25 = scalar_lea.sflag [#allocation4], 1
    %26 = vsyncpa %s25, 0
    loop: start=0, step=1, limit=4
    $region2: #{tpu_custom_call.1} parent=1 // loop_pre_header
      _
    $region3: #{tpu_custom_call.1} parent=1 // loop_header
      %s28 = sphi 0, %s32
      %p29 = scmp.ge.s32.totalorder %s28, 4
      %s38 = sphi 0, %s40
      %s41 = sphi 0, %s38
      %s42 = sphi 0, %s41
      %s58 = sphi 0, %s42
      %s62 = sphi 0, %s62
      %s64 = sphi 0, %s62
      %s65 = sphi 0, %s64
      %s79 = sphi 0, %s65
      %s83 = sphi 0, %s83
      %s85 = sphi 0, %s83
      %s86 = sphi 0, %s85
      %s100 = sphi 0, %s86
      %s104 = sphi 0, %s104
      %s106 = sphi 0, %s104
      %s107 = sphi 0, %s106
      %s121 = sphi 0, %s107
      %s125 = sphi 0, %s125
      %s127 = sphi 0, %s125
      %s128 = sphi 0, %s127
      %s142 = sphi 0, %s128
      %s146 = sphi 0, %s146
      %s148 = sphi 0, %s146
      %s149 = sphi 0, %s148
      %s163 = sphi 0, %s149
      %s167 = sphi 0, %s167
      %s169 = sphi 0, %s167
      %s170 = sphi 0, %s169
      %s184 = sphi 0, %s170
      %s188 = sphi 0, %s188
      %s190 = sphi 0, %s188
      %s191 = sphi 0, %s190
      %s205 = sphi 0, %s191
      %s209 = sphi 0, %s209
      %s211 = sphi 0, %s209
      %s212 = sphi 0, %s211
      %s226 = sphi 0, %s212
      %s230 = sphi 0, %s230
      %s232 = sphi 0, %s230
      %s233 = sphi 0, %s232
      %s247 = sphi 0, %s233
      %s251 = sphi 0, %s251
      %s253 = sphi 0, %s251
      %s254 = sphi 0, %s253
      %s268 = sphi 0, %s254
      %s272 = sphi 0, %s272
      %s274 = sphi 0, %s272
      %s275 = sphi 0, %s274
      %s289 = sphi 0, %s275
      %s295 = sphi 0, %s297
      %s298 = sphi 0, %s295
      %s299 = sphi 0, %s298
      %s315 = sphi 0, %s299
    $region4: #{tpu_custom_call.1} parent=1 // loop_header_branch
      %31 = sbr.rel (%p29) target = $region8
    $region5: #{tpu_custom_call.1} parent=1 // loop_body
      %s33 = ssub.s32 %s28, 1
      %s34 = ssub.s32 %s28, 2
      %s35 = sadd.s32 %s28, 1
      %s36 = ssub.s32 %s28, %s35
      %p37 = scmp.eq.s32.totalorder %s36, 0
      %s39 = sadd.s32 %s38, 1
      %s40 = scalar_select %p37, %s38, %s39
      %p43 = pneg %p37
      %p44 = scmp.eq.s32.totalorder %s28, 1
      %p45 = por %p43, %p44
      %p46 = scmp.ne.s32.totalorder %s38, %s41
      %p47 = scmp.eq.s32.totalorder %s28, 0
      %p48 = por %p46, %p47
      %p49 = scmp.ne.s32.totalorder %s38, %s41
      %p50 = scmp.eq.s32.totalorder %s33, 1
      %p51 = por %p49, %p50
      %p52 = scmp.ne.s32.totalorder %s41, %s42
      %p53 = scmp.eq.s32.totalorder %s33, 0
      %p54 = por %p52, %p53
      %p55 = scmp.ne.s32.totalorder %s41, %s42
      %p56 = scmp.eq.s32.totalorder %s34, 1
      %p57 = por %p55, %p56
      %p59 = scmp.ne.s32.totalorder %s42, %s58
      %p60 = scmp.eq.s32.totalorder %s34, 0
      %p61 = por %p59, %p60
      %s63 = sadd.s32 %s62, 1
      %p66 = scmp.eq.s32.totalorder %s28, 1
      %p67 = scmp.ne.s32.totalorder %s62, %s64
      %p68 = scmp.eq.s32.totalorder %s28, 0
      %p69 = por %p67, %p68
      %p70 = scmp.ne.s32.totalorder %s62, %s64
      %p71 = scmp.eq.s32.totalorder %s33, 1
      %p72 = por %p70, %p71
      %p73 = scmp.ne.s32.totalorder %s64, %s65
      %p74 = scmp.eq.s32.totalorder %s33, 0
      %p75 = por %p73, %p74
      %p76 = scmp.ne.s32.totalorder %s64, %s65
      %p77 = scmp.eq.s32.totalorder %s34, 1
      %p78 = por %p76, %p77
      %p80 = scmp.ne.s32.totalorder %s65, %s79
      %p81 = scmp.eq.s32.totalorder %s34, 0
      %p82 = por %p80, %p81
      %s84 = sadd.s32 %s83, 1
      %p87 = scmp.eq.s32.totalorder %s28, 1
      %p88 = scmp.ne.s32.totalorder %s83, %s85
      %p89 = scmp.eq.s32.totalorder %s28, 0
      %p90 = por %p88, %p89
      %p91 = scmp.ne.s32.totalorder %s83, %s85
      %p92 = scmp.eq.s32.totalorder %s33, 1
      %p93 = por %p91, %p92
      %p94 = scmp.ne.s32.totalorder %s85, %s86
      %p95 = scmp.eq.s32.totalorder %s33, 0
      %p96 = por %p94, %p95
      %p97 = scmp.ne.s32.totalorder %s85, %s86
      %p98 = scmp.eq.s32.totalorder %s34, 1
      %p99 = por %p97, %p98
      %p101 = scmp.ne.s32.totalorder %s86, %s100
      %p102 = scmp.eq.s32.totalorder %s34, 0
      %p103 = por %p101, %p102
      %s105 = sadd.s32 %s104, 1
      %p108 = scmp.eq.s32.totalorder %s28, 1
      %p109 = scmp.ne.s32.totalorder %s104, %s106
      %p110 = scmp.eq.s32.totalorder %s28, 0
      %p111 = por %p109, %p110
      %p112 = scmp.ne.s32.totalorder %s104, %s106
      %p113 = scmp.eq.s32.totalorder %s33, 1
      %p114 = por %p112, %p113
      %p115 = scmp.ne.s32.totalorder %s106, %s107
      %p116 = scmp.eq.s32.totalorder %s33, 0
      %p117 = por %p115, %p116
      %p118 = scmp.ne.s32.totalorder %s106, %s107
      %p119 = scmp.eq.s32.totalorder %s34, 1
      %p120 = por %p118, %p119
      %p122 = scmp.ne.s32.totalorder %s107, %s121
      %p123 = scmp.eq.s32.totalorder %s34, 0
      %p124 = por %p122, %p123
      %s126 = sadd.s32 %s125, 1
      %p129 = scmp.eq.s32.totalorder %s28, 1
      %p130 = scmp.ne.s32.totalorder %s125, %s127
      %p131 = scmp.eq.s32.totalorder %s28, 0
      %p132 = por %p130, %p131
      %p133 = scmp.ne.s32.totalorder %s125, %s127
      %p134 = scmp.eq.s32.totalorder %s33, 1
      %p135 = por %p133, %p134
      %p136 = scmp.ne.s32.totalorder %s127, %s128
      %p137 = scmp.eq.s32.totalorder %s33, 0
      %p138 = por %p136, %p137
      %p139 = scmp.ne.s32.totalorder %s127, %s128
      %p140 = scmp.eq.s32.totalorder %s34, 1
      %p141 = por %p139, %p140
      %p143 = scmp.ne.s32.totalorder %s128, %s142
      %p144 = scmp.eq.s32.totalorder %s34, 0
      %p145 = por %p143, %p144
      %s147 = sadd.s32 %s146, 1
      %p150 = scmp.eq.s32.totalorder %s28, 1
      %p151 = scmp.ne.s32.totalorder %s146, %s148
      %p152 = scmp.eq.s32.totalorder %s28, 0
      %p153 = por %p151, %p152
      %p154 = scmp.ne.s32.totalorder %s146, %s148
      %p155 = scmp.eq.s32.totalorder %s33, 1
      %p156 = por %p154, %p155
      %p157 = scmp.ne.s32.totalorder %s148, %s149
      %p158 = scmp.eq.s32.totalorder %s33, 0
      %p159 = por %p157, %p158
      %p160 = scmp.ne.s32.totalorder %s148, %s149
      %p161 = scmp.eq.s32.totalorder %s34, 1
      %p162 = por %p160, %p161
      %p164 = scmp.ne.s32.totalorder %s149, %s163
      %p165 = scmp.eq.s32.totalorder %s34, 0
      %p166 = por %p164, %p165
      %s168 = sadd.s32 %s167, 1
      %p171 = scmp.eq.s32.totalorder %s28, 1
      %p172 = scmp.ne.s32.totalorder %s167, %s169
      %p173 = scmp.eq.s32.totalorder %s28, 0
      %p174 = por %p172, %p173
      %p175 = scmp.ne.s32.totalorder %s167, %s169
      %p176 = scmp.eq.s32.totalorder %s33, 1
      %p177 = por %p175, %p176
      %p178 = scmp.ne.s32.totalorder %s169, %s170
      %p179 = scmp.eq.s32.totalorder %s33, 0
      %p180 = por %p178, %p179
      %p181 = scmp.ne.s32.totalorder %s169, %s170
      %p182 = scmp.eq.s32.totalorder %s34, 1
      %p183 = por %p181, %p182
      %p185 = scmp.ne.s32.totalorder %s170, %s184
      %p186 = scmp.eq.s32.totalorder %s34, 0
      %p187 = por %p185, %p186
      %s189 = sadd.s32 %s188, 1
      %p192 = scmp.eq.s32.totalorder %s28, 1
      %p193 = scmp.ne.s32.totalorder %s188, %s190
      %p194 = scmp.eq.s32.totalorder %s28, 0
      %p195 = por %p193, %p194
      %p196 = scmp.ne.s32.totalorder %s188, %s190
      %p197 = scmp.eq.s32.totalorder %s33, 1
      %p198 = por %p196, %p197
      %p199 = scmp.ne.s32.totalorder %s190, %s191
      %p200 = scmp.eq.s32.totalorder %s33, 0
      %p201 = por %p199, %p200
      %p202 = scmp.ne.s32.totalorder %s190, %s191
      %p203 = scmp.eq.s32.totalorder %s34, 1
      %p204 = por %p202, %p203
      %p206 = scmp.ne.s32.totalorder %s191, %s205
      %p207 = scmp.eq.s32.totalorder %s34, 0
      %p208 = por %p206, %p207
      %s210 = sadd.s32 %s209, 1
      %p213 = scmp.eq.s32.totalorder %s28, 1
      %p214 = scmp.ne.s32.totalorder %s209, %s211
      %p215 = scmp.eq.s32.totalorder %s28, 0
      %p216 = por %p214, %p215
      %p217 = scmp.ne.s32.totalorder %s209, %s211
      %p218 = scmp.eq.s32.totalorder %s33, 1
      %p219 = por %p217, %p218
      %p220 = scmp.ne.s32.totalorder %s211, %s212
      %p221 = scmp.eq.s32.totalorder %s33, 0
      %p222 = por %p220, %p221
      %p223 = scmp.ne.s32.totalorder %s211, %s212
      %p224 = scmp.eq.s32.totalorder %s34, 1
      %p225 = por %p223, %p224
      %p227 = scmp.ne.s32.totalorder %s212, %s226
      %p228 = scmp.eq.s32.totalorder %s34, 0
      %p229 = por %p227, %p228
      %s231 = sadd.s32 %s230, 1
      %p234 = scmp.eq.s32.totalorder %s28, 1
      %p235 = scmp.ne.s32.totalorder %s230, %s232
      %p236 = scmp.eq.s32.totalorder %s28, 0
      %p237 = por %p235, %p236
      %p238 = scmp.ne.s32.totalorder %s230, %s232
      %p239 = scmp.eq.s32.totalorder %s33, 1
      %p240 = por %p238, %p239
      %p241 = scmp.ne.s32.totalorder %s232, %s233
      %p242 = scmp.eq.s32.totalorder %s33, 0
      %p243 = por %p241, %p242
      %p244 = scmp.ne.s32.totalorder %s232, %s233
      %p245 = scmp.eq.s32.totalorder %s34, 1
      %p246 = por %p244, %p245
      %p248 = scmp.ne.s32.totalorder %s233, %s247
      %p249 = scmp.eq.s32.totalorder %s34, 0
      %p250 = por %p248, %p249
      %s252 = sadd.s32 %s251, 1
      %p255 = scmp.eq.s32.totalorder %s28, 1
      %p256 = scmp.ne.s32.totalorder %s251, %s253
      %p257 = scmp.eq.s32.totalorder %s28, 0
      %p258 = por %p256, %p257
      %p259 = scmp.ne.s32.totalorder %s251, %s253
      %p260 = scmp.eq.s32.totalorder %s33, 1
      %p261 = por %p259, %p260
      %p262 = scmp.ne.s32.totalorder %s253, %s254
      %p263 = scmp.eq.s32.totalorder %s33, 0
      %p264 = por %p262, %p263
      %p265 = scmp.ne.s32.totalorder %s253, %s254
      %p266 = scmp.eq.s32.totalorder %s34, 1
      %p267 = por %p265, %p266
      %p269 = scmp.ne.s32.totalorder %s254, %s268
      %p270 = scmp.eq.s32.totalorder %s34, 0
      %p271 = por %p269, %p270
      %s273 = sadd.s32 %s272, 1
      %p276 = scmp.eq.s32.totalorder %s28, 1
      %p277 = scmp.ne.s32.totalorder %s272, %s274
      %p278 = scmp.eq.s32.totalorder %s28, 0
      %p279 = por %p277, %p278
      %p280 = scmp.ne.s32.totalorder %s272, %s274
      %p281 = scmp.eq.s32.totalorder %s33, 1
      %p282 = por %p280, %p281
      %p283 = scmp.ne.s32.totalorder %s274, %s275
      %p284 = scmp.eq.s32.totalorder %s33, 0
      %p285 = por %p283, %p284
      %p286 = scmp.ne.s32.totalorder %s274, %s275
      %p287 = scmp.eq.s32.totalorder %s34, 1
      %p288 = por %p286, %p287
      %p290 = scmp.ne.s32.totalorder %s275, %s289
      %p291 = scmp.eq.s32.totalorder %s34, 0
      %p292 = por %p290, %p291
      %s293 = ssub.s32 %s28, %s35
      %p294 = scmp.eq.s32.totalorder %s293, 0
      %s296 = sadd.s32 %s295, 1
      %s297 = scalar_select %p294, %s295, %s296
      %p300 = pneg %p294
      %p301 = scmp.eq.s32.totalorder %s28, 1
      %p302 = por %p300, %p301
      %p303 = scmp.ne.s32.totalorder %s295, %s298
      %p304 = scmp.eq.s32.totalorder %s28, 0
      %p305 = por %p303, %p304
      %p306 = scmp.ne.s32.totalorder %s295, %s298
      %p307 = scmp.eq.s32.totalorder %s33, 1
      %p308 = por %p306, %p307
      %p309 = scmp.ne.s32.totalorder %s298, %s299
      %p310 = scmp.eq.s32.totalorder %s33, 0
      %p311 = por %p309, %p310
      %p312 = scmp.ne.s32.totalorder %s298, %s299
      %p313 = scmp.eq.s32.totalorder %s34, 1
      %p314 = por %p312, %p313
      %p316 = scmp.ne.s32.totalorder %s299, %s315
      %p317 = scmp.eq.s32.totalorder %s34, 0
      %p318 = por %p316, %p317
      %p319 = scmp.le.s32.totalorder 1, %s28
      %p320 = scmp.lt.s32.totalorder %s28, 3
      %p321 = pnand %p319, %p320
      %p322 = pneg %p321
      // Predicated region
      $region9: #{tpu_custom_call.1} parent=5 // pred_check
        _
      $region10: #{tpu_custom_call.1} parent=5 // pred_check_branch
        %324 = sbr.rel (%p321) target = $region12
      $region11: #{tpu_custom_call.1} parent=5 // pred_region
        %s325 = ssub.s32 %s28, 1
        // Predicated region
        $region13: #{tpu_custom_call.1} parent=11 // pred_check
          %p326 = pneg %p75
        $region14: #{tpu_custom_call.1} parent=11 // pred_check_branch
          %328 = sbr.rel (%p326) target = $region16
        $region15: #{tpu_custom_call.1} parent=11 // pred_region
          %s330 = ssub.s32 128, 128
          %331 = vsyncadd [#allocation6], %s330
          %s333 = sshll.u32 [#allocation5], 4
          %s334 = int_to_ptr.vmem [resolvable:$true] %s333
          %336 = dma.hbm_to_vmem [thread:$0]  %s1, 128, %s334, [#allocation6]
        $region16: #{tpu_custom_call.1} parent=11 // pred_fallthru
          _
        // Predicated region
        $region17: #{tpu_custom_call.1} parent=11 // pred_check
          %p337 = pneg %p96
        $region18: #{tpu_custom_call.1} parent=11 // pred_check_branch
          %339 = sbr.rel (%p337) target = $region20
        $region19: #{tpu_custom_call.1} parent=11 // pred_region
          _
        $region20: #{tpu_custom_call.1} parent=11 // pred_fallthru
          _
        // Predicated region
        $region21: #{tpu_custom_call.1} parent=11 // pred_check
          %p340 = pneg %p117
        $region22: #{tpu_custom_call.1} parent=11 // pred_check_branch
          %342 = sbr.rel (%p340) target = $region24
        $region23: #{tpu_custom_call.1} parent=11 // pred_region
          %s344 = ssub.s32 128, 128
          %345 = vsyncadd [#allocation6], %s344
          %s347 = sshll.u32 [#allocation7], 4
          %s348 = int_to_ptr.vmem [resolvable:$true] %s347
          %350 = dma.hbm_to_vmem [thread:$0]  %s3, 128, %s348, [#allocation6]
        $region24: #{tpu_custom_call.1} parent=11 // pred_fallthru
          _
        // Predicated region
        $region25: #{tpu_custom_call.1} parent=11 // pred_check
          %p351 = pneg %p138
        $region26: #{tpu_custom_call.1} parent=11 // pred_check_branch
          %353 = sbr.rel (%p351) target = $region28
        $region27: #{tpu_custom_call.1} parent=11 // pred_region
          _
        $region28: #{tpu_custom_call.1} parent=11 // pred_fallthru
          _
        // Predicated region
        $region29: #{tpu_custom_call.1} parent=11 // pred_check
          %p354 = pneg %p159
        $region30: #{tpu_custom_call.1} parent=11 // pred_check_branch
          %356 = sbr.rel (%p354) target = $region32
        $region31: #{tpu_custom_call.1} parent=11 // pred_region
          %s358 = ssub.s32 128, 128
          %359 = vsyncadd [#allocation9], %s358
          %s361 = sshll.u32 [#allocation8], 4
          %s362 = int_to_ptr.vmem [resolvable:$true] %s361
          %364 = dma.hbm_to_vmem [thread:$0]  %s5, 128, %s362, [#allocation9]
        $region32: #{tpu_custom_call.1} parent=11 // pred_fallthru
          _
        // Predicated region
        $region33: #{tpu_custom_call.1} parent=11 // pred_check
          %p365 = pneg %p180
        $region34: #{tpu_custom_call.1} parent=11 // pred_check_branch
          %367 = sbr.rel (%p365) target = $region36
        $region35: #{tpu_custom_call.1} parent=11 // pred_region
          %s369 = ssub.s32 128, 128
          %370 = vsyncadd [#allocation9], %s369
          %s372 = sshll.u32 [#allocation10], 4
          %s373 = int_to_ptr.vmem [resolvable:$true] %s372
          %375 = dma.hbm_to_vmem [thread:$0]  %s6, 128, %s373, [#allocation9]
        $region36: #{tpu_custom_call.1} parent=11 // pred_fallthru
          _
        // Predicated region
        $region37: #{tpu_custom_call.1} parent=11 // pred_check
          %p376 = pneg %p201
        $region38: #{tpu_custom_call.1} parent=11 // pred_check_branch
          %378 = sbr.rel (%p376) target = $region40
        $region39: #{tpu_custom_call.1} parent=11 // pred_region
          %s380 = ssub.s32 128, 128
          %381 = vsyncadd [#allocation12], %s380
          %s383 = sshll.u32 [#allocation11], 4
          %s384 = int_to_ptr.vmem [resolvable:$true] %s383
          %386 = dma.hbm_to_vmem [thread:$0]  %s7, 128, %s384, [#allocation12]
        $region40: #{tpu_custom_call.1} parent=11 // pred_fallthru
          _
        // Predicated region
        $region41: #{tpu_custom_call.1} parent=11 // pred_check
          %p387 = pneg %p222
        $region42: #{tpu_custom_call.1} parent=11 // pred_check_branch
          %389 = sbr.rel (%p387) target = $region44
        $region43: #{tpu_custom_call.1} parent=11 // pred_region
          _
        $region44: #{tpu_custom_call.1} parent=11 // pred_fallthru
          _
        // Predicated region
        $region45: #{tpu_custom_call.1} parent=11 // pred_check
          %p390 = pneg %p243
        $region46: #{tpu_custom_call.1} parent=11 // pred_check_branch
          %392 = sbr.rel (%p390) target = $region48
        $region47: #{tpu_custom_call.1} parent=11 // pred_region
          %s394 = ssub.s32 512, 512
          %395 = vsyncadd [#allocation12], %s394
          %s396 = sshll.u32 [#allocation13], 4
          %s397 = int_to_ptr.vmem [resolvable:$true] %s396
          %402 = dma.hbm_to_vmem [thread:$0]  %s9, 512, %s397, [#allocation12], 256, 256, 16
        $region48: #{tpu_custom_call.1} parent=11 // pred_fallthru
          _
        // Predicated region
        $region49: #{tpu_custom_call.1} parent=11 // pred_check
          %p403 = pneg %p264
        $region50: #{tpu_custom_call.1} parent=11 // pred_check_branch
          %405 = sbr.rel (%p403) target = $region52
        $region51: #{tpu_custom_call.1} parent=11 // pred_region
          %s407 = ssub.s32 256, 256
          %408 = vsyncadd [#allocation15], %s407
          %s409 = sshll.u32 [#allocation14], 4
          %s410 = int_to_ptr.vmem [resolvable:$true] %s409
          %415 = dma.hbm_to_vmem [thread:$0]  %s10, 256, %s410, [#allocation15], 128, 128, 8
        $region52: #{tpu_custom_call.1} parent=11 // pred_fallthru
          _
        // Predicated region
        $region53: #{tpu_custom_call.1} parent=11 // pred_check
          %p416 = pneg %p285
        $region54: #{tpu_custom_call.1} parent=11 // pred_check_branch
          %418 = sbr.rel (%p416) target = $region56
        $region55: #{tpu_custom_call.1} parent=11 // pred_region
          _
        $region56: #{tpu_custom_call.1} parent=11 // pred_fallthru
          _
      $region12: #{tpu_custom_call.1} parent=5 // pred_fallthru
        _
      %p419 = scmp.lt.s32.totalorder %s28, 2
      // Predicated region
      $region57: #{tpu_custom_call.1} parent=5 // pred_check
        %p420 = pneg %p419
      $region58: #{tpu_custom_call.1} parent=5 // pred_check_branch
        %422 = sbr.rel (%p420) target = $region60
      $region59: #{tpu_custom_call.1} parent=5 // pred_region
        // Predicated region
        $region61: #{tpu_custom_call.1} parent=59 // pred_check
          %p423 = pneg %p48
        $region62: #{tpu_custom_call.1} parent=59 // pred_check_branch
          %425 = sbr.rel (%p423) target = $region64
        $region63: #{tpu_custom_call.1} parent=59 // pred_region
          %s426 = sand.u32 %s38, 1
          %s427 = scalar_lea.sflag [#allocation3], %s426
          %s428 = sand.u32 %s38, 1
          %s429 = smul.addr %s428, 16
          %s430 = scalar_lea.vmem [#allocation2], %s429
          %s432 = ssub.s32 256, 256
          %433 = vsyncadd %s427, %s432
          %s434 = smul.addr %s28, 2
          %s435 = smul.addr %s434, 128
          %s436 = scalar_lea.hbm %s0, %s435
          %s438 = sshll.u32 %s430, 4
          %s439 = int_to_ptr.vmem [resolvable:$true] %s438
          %441 = dma.hbm_to_vmem [thread:$0]  %s436, 256, %s439, %s427
        $region64: #{tpu_custom_call.1} parent=59 // pred_fallthru
          _
      $region60: #{tpu_custom_call.1} parent=5 // pred_fallthru
        _
      %p442 = scmp.le.s32.totalorder 1, %s28
      %p443 = scmp.lt.s32.totalorder %s28, 3
      %p444 = pnand %p442, %p443
      %p445 = pneg %p444
      // Predicated region
      $region65: #{tpu_custom_call.1} parent=5 // pred_check
        _
      $region66: #{tpu_custom_call.1} parent=5 // pred_check_branch
        %447 = sbr.rel (%p444) target = $region68
      $region67: #{tpu_custom_call.1} parent=5 // pred_region
        %s448 = ssub.s32 %s28, 1
        %s449 = sand.u32 %s41, 1
        %s450 = scalar_lea.sflag [#allocation3], %s449
        %s451 = sand.u32 %s41, 1
        %s452 = smul.addr %s451, 16
        %s453 = scalar_lea.vmem [#allocation2], %s452
        // Predicated region
        $region69: #{tpu_custom_call.1} parent=67 // pred_check
          %p454 = pneg %p54
        $region70: #{tpu_custom_call.1} parent=67 // pred_check_branch
          %456 = sbr.rel (%p454) target = $region72
        $region71: #{tpu_custom_call.1} parent=67 // pred_region
          %457 = dma.done %s450, 256
        $region72: #{tpu_custom_call.1} parent=67 // pred_fallthru
          _
        // Predicated region
        $region73: #{tpu_custom_call.1} parent=67 // pred_check
          %p458 = pneg %p75
        $region74: #{tpu_custom_call.1} parent=67 // pred_check_branch
          %460 = sbr.rel (%p458) target = $region76
        $region75: #{tpu_custom_call.1} parent=67 // pred_region
          %461 = dma.done [#allocation6], 128
        $region76: #{tpu_custom_call.1} parent=67 // pred_fallthru
          _
        // Predicated region
        $region77: #{tpu_custom_call.1} parent=67 // pred_check
          %p462 = pneg %p117
        $region78: #{tpu_custom_call.1} parent=67 // pred_check_branch
          %464 = sbr.rel (%p462) target = $region80
        $region79: #{tpu_custom_call.1} parent=67 // pred_region
          %465 = dma.done [#allocation6], 128
        $region80: #{tpu_custom_call.1} parent=67 // pred_fallthru
          _
        // Predicated region
        $region81: #{tpu_custom_call.1} parent=67 // pred_check
          %p466 = pneg %p159
        $region82: #{tpu_custom_call.1} parent=67 // pred_check_branch
          %468 = sbr.rel (%p466) target = $region84
        $region83: #{tpu_custom_call.1} parent=67 // pred_region
          %469 = dma.done [#allocation9], 128
        $region84: #{tpu_custom_call.1} parent=67 // pred_fallthru
          _
        // Predicated region
        $region85: #{tpu_custom_call.1} parent=67 // pred_check
          %p470 = pneg %p180
        $region86: #{tpu_custom_call.1} parent=67 // pred_check_branch
          %472 = sbr.rel (%p470) target = $region88
        $region87: #{tpu_custom_call.1} parent=67 // pred_region
          %473 = dma.done [#allocation9], 128
        $region88: #{tpu_custom_call.1} parent=67 // pred_fallthru
          _
        // Predicated region
        $region89: #{tpu_custom_call.1} parent=67 // pred_check
          %p474 = pneg %p201
        $region90: #{tpu_custom_call.1} parent=67 // pred_check_branch
          %476 = sbr.rel (%p474) target = $region92
        $region91: #{tpu_custom_call.1} parent=67 // pred_region
          %477 = dma.done [#allocation12], 128
        $region92: #{tpu_custom_call.1} parent=67 // pred_fallthru
          _
        // Predicated region
        $region93: #{tpu_custom_call.1} parent=67 // pred_check
          %p478 = pneg %p243
        $region94: #{tpu_custom_call.1} parent=67 // pred_check_branch
          %480 = sbr.rel (%p478) target = $region96
        $region95: #{tpu_custom_call.1} parent=67 // pred_region
          %481 = dma.done [#allocation12], 512
        $region96: #{tpu_custom_call.1} parent=67 // pred_fallthru
          _
        // Predicated region
        $region97: #{tpu_custom_call.1} parent=67 // pred_check
          %p482 = pneg %p264
        $region98: #{tpu_custom_call.1} parent=67 // pred_check_branch
          %484 = sbr.rel (%p482) target = $region100
        $region99: #{tpu_custom_call.1} parent=67 // pred_region
          %485 = dma.done [#allocation15], 256
        $region100: #{tpu_custom_call.1} parent=67 // pred_fallthru
          _
        %s486 = sand.u32 %s41, 1
        %s487 = scalar_lea.sflag [#allocation3], %s486
        %s488 = sand.u32 %s41, 1
        %s489 = smul.addr %s488, 16
        %s490 = scalar_lea.vmem [#allocation2], %s489
        %p491 = pneg %p54
        %p492 = pneg %p51
        %p493 = pneg %p75
        %p494 = pneg %p72
        %p495 = pneg %p96
        %p496 = pneg %p93
        %p497 = pneg %p117
        %p498 = pneg %p114
        %p499 = pneg %p138
        %p500 = pneg %p135
        %p501 = pneg %p159
        %p502 = pneg %p156
        %p503 = pneg %p180
        %p504 = pneg %p177
        %p505 = pneg %p201
        %p506 = pneg %p198
        %p507 = pneg %p222
        %p508 = pneg %p219
        %p509 = pneg %p243
        %p510 = pneg %p240
        %p511 = pneg %p264
        %p512 = pneg %p261
        %p513 = pneg %p285
        %p514 = pneg %p282
        %p515 = pneg %p311
        %p516 = pneg %p308
        %s517 = sand.u32 %s298, 1
        %s518 = scalar_lea.sflag [#allocation4], %s517
        %s519 = sand.u32 %s298, 1
        %s520 = smul.addr %s519, 32
        %s521 = scalar_lea.vmem [#allocation16], %s520
        %v522 = vld [vmem:[%s453] sm:$0xff]
        %v523 = vld [vmem:[%s453 + $0x8] sm:$0xff]
        %v524 = vadd.f32 %v522, %v523
        %525 = vadd.xlane.f32.xlu0 %v524
        %v526 = vpop.xlane.xlu0 %525
        %v527 = vrcp.pop 256.0
        %v528 = vmul.f32 %v526, %v527
        %v529 = vld [vmem:[#allocation5] sm:$0xff]
        %v530 = vld [vmem:[%s2] sm:$0xff]
        %532 = vset.pattern.permute.xlu0 0
        %533 = vperm.xlu0 %532, %v530
        %v534 = vpop.permute.xlu0 %533
        %vm536 = vcmask 64512
        %v538 = vsel %vm536, %v529, 0
        %540 = vmatprep.subr.mxu0 0.0
        %541 = vmatpush1.msra.mxu0 0.0
        %542 = vmatprep.subr.mxu0 0.0
        %543 = vmatpush1.msra.mxu0 0.0
        %544 = vmatprep.subr.mxu0 0.0
        %545 = vmatpush1.msra.mxu0 0.0
        %546 = vmatprep.subr.mxu0 0.0
        %547 = vmatpush1.msra.mxu0 0.0
        %548 = vmatprep.subr.mxu0 0.0
        %549 = vmatpush1.msra.mxu0 0.0
        %550 = vmatprep.subr.mxu0 0.0
        %551 = vmatpush1.msra.mxu0 0.0
        %552 = vmatprep.subr.mxu0 0.0
        %553 = vmatpush1.msra.mxu0 0.0
        %554 = vmatprep.subr.mxu0 0.0
        %555 = vmatpush1.msra.mxu0 0.0
        %556 = vmatprep.subr.mxu0 0.0
        %557 = vmatpush1.msra.mxu0 0.0
        %558 = vmatprep.subr.mxu0 0.0
        %559 = vmatpush1.msra.mxu0 0.0
        %560 = vmatprep.subr.mxu0 0.0
        %561 = vmatpush1.msra.mxu0 0.0
        %562 = vmatprep.subr.mxu0 0.0
        %563 = vmatpush1.msra.mxu0 0.0
        %564 = vmatprep.subr.mxu0 0.0
        %565 = vmatpush1.msra.mxu0 0.0
        %566 = vmatprep.subr.mxu0 0.0
        %567 = vmatpush1.msra.mxu0 0.0
        %568 = vmatprep.subr.mxu0 0.0
        %569 = vmatpush1.msra.mxu0 0.0
        %570 = vmatprep.subr.mxu0 %v528
        %571 = vmatpush1.msra.mxu0 %v528
        %572 = vmatprep.subr.mxu0 0.0
        %573 = vmatpush2.msra.mxu0 0.0
        %574 = vmatprep.subr.mxu0 0.0
        %575 = vmatpush2.msra.mxu0 0.0
        %576 = vmatprep.subr.mxu0 0.0
        %577 = vmatpush2.msra.mxu0 0.0
        %578 = vmatprep.subr.mxu0 0.0
        %579 = vmatpush2.msra.mxu0 0.0
        %580 = vmatprep.subr.mxu0 0.0
        %581 = vmatpush2.msra.mxu0 0.0
        %582 = vmatprep.subr.mxu0 0.0
        %583 = vmatpush2.msra.mxu0 0.0
        %584 = vmatprep.subr.mxu0 0.0
        %585 = vmatpush2.msra.mxu0 0.0
        %586 = vmatprep.subr.mxu0 0.0
        %587 = vmatpush2.msra.mxu0 0.0
        %588 = vmatprep.subr.mxu0 0.0
        %589 = vmatpush2.msra.mxu0 0.0
        %590 = vmatprep.subr.mxu0 0.0
        %591 = vmatpush2.msra.mxu0 0.0
        %592 = vmatprep.subr.mxu0 0.0
        %593 = vmatpush2.msra.mxu0 0.0
        %594 = vmatprep.subr.mxu0 0.0
        %595 = vmatpush2.msra.mxu0 0.0
        %596 = vmatprep.subr.mxu0 0.0
        %597 = vmatpush2.msra.mxu0 0.0
        %598 = vmatprep.subr.mxu0 0.0
        %599 = vmatpush2.msra.mxu0 0.0
        %600 = vmatprep.subr.mxu0 0.0
        %601 = vmatpush2.msra.mxu0 0.0
        %602 = vmatprep.subr.mxu0 0.0
        %603 = vmatpush2.msra.mxu0 0.0
        %604 = vmatprep.mubr.f32.mxu0 0.0
        %605 = vmatmul.mubr.f32.gmra.mxu0 %v538
        %v606 = vpop.f32.mrf.mxu0
        %v607 = vadd.f32 %v534, %v606
        %v608 = vpop.f32.mrf.mxu0
        %v609 = vadd.f32 %v534, %v608
        %610 = vdwg.mxu0
        %v611 = vmax.f32 %v607, 0.0
        %v612 = vmax.f32 %v609, 0.0
        %v613 = vld [vmem:[#allocation7] sm:$0xff]
        %v614 = vld [vmem:[%s4] sm:$0xff]
        %616 = vset.pattern.permute.xlu0 0
        %617 = vperm.xlu0 %616, %v614
        %v618 = vpop.permute.xlu0 %617
        %v621 = vsel %vm536, %v613, 0
        %623 = vmatprep.subr.mxu0 0.0
        %624 = vmatpush1.msra.mxu0 0.0
        %625 = vmatprep.subr.mxu0 0.0
        %626 = vmatpush1.msra.mxu0 0.0
        %627 = vmatprep.subr.mxu0 0.0
        %628 = vmatpush1.msra.mxu0 0.0
        %629 = vmatprep.subr.mxu0 0.0
        %630 = vmatpush1.msra.mxu0 0.0
        %631 = vmatprep.subr.mxu0 0.0
        %632 = vmatpush1.msra.mxu0 0.0
        %633 = vmatprep.subr.mxu0 0.0
        %634 = vmatpush1.msra.mxu0 0.0
        %635 = vmatprep.subr.mxu0 0.0
        %636 = vmatpush1.msra.mxu0 0.0
        %637 = vmatprep.subr.mxu0 0.0
        %638 = vmatpush1.msra.mxu0 0.0
        %639 = vmatprep.subr.mxu0 0.0
        %640 = vmatpush1.msra.mxu0 0.0
        %641 = vmatprep.subr.mxu0 0.0
        %642 = vmatpush1.msra.mxu0 0.0
        %643 = vmatprep.subr.mxu0 0.0
        %644 = vmatpush1.msra.mxu0 0.0
        %645 = vmatprep.subr.mxu0 0.0
        %646 = vmatpush1.msra.mxu0 0.0
        %647 = vmatprep.subr.mxu0 0.0
        %648 = vmatpush1.msra.mxu0 0.0
        %649 = vmatprep.subr.mxu0 0.0
        %650 = vmatpush1.msra.mxu0 0.0
        %651 = vmatprep.subr.mxu0 0.0
        %652 = vmatpush1.msra.mxu0 0.0
        %653 = vmatprep.subr.mxu0 %v523
        %654 = vmatpush1.msra.mxu0 %v522
        %655 = vmatprep.subr.mxu0 0.0
        %656 = vmatpush2.msra.mxu0 0.0
        %657 = vmatprep.subr.mxu0 0.0
        %658 = vmatpush2.msra.mxu0 0.0
        %659 = vmatprep.subr.mxu0 0.0
        %660 = vmatpush2.msra.mxu0 0.0
        %661 = vmatprep.subr.mxu0 0.0
        %662 = vmatpush2.msra.mxu0 0.0
        %663 = vmatprep.subr.mxu0 0.0
        %664 = vmatpush2.msra.mxu0 0.0
        %665 = vmatprep.subr.mxu0 0.0
        %666 = vmatpush2.msra.mxu0 0.0
        %667 = vmatprep.subr.mxu0 0.0
        %668 = vmatpush2.msra.mxu0 0.0
        %669 = vmatprep.subr.mxu0 0.0
        %670 = vmatpush2.msra.mxu0 0.0
        %671 = vmatprep.subr.mxu0 0.0
        %672 = vmatpush2.msra.mxu0 0.0
        %673 = vmatprep.subr.mxu0 0.0
        %674 = vmatpush2.msra.mxu0 0.0
        %675 = vmatprep.subr.mxu0 0.0
        %676 = vmatpush2.msra.mxu0 0.0
        %677 = vmatprep.subr.mxu0 0.0
        %678 = vmatpush2.msra.mxu0 0.0
        %679 = vmatprep.subr.mxu0 0.0
        %680 = vmatpush2.msra.mxu0 0.0
        %681 = vmatprep.subr.mxu0 0.0
        %682 = vmatpush2.msra.mxu0 0.0
        %683 = vmatprep.subr.mxu0 0.0
        %684 = vmatpush2.msra.mxu0 0.0
        %685 = vmatprep.subr.mxu0 0.0
        %686 = vmatpush2.msra.mxu0 0.0
        %687 = vmatprep.mubr.f32.mxu0 0.0
        %688 = vmatmul.mubr.f32.gmra.mxu0 %v621
        %v689 = vpop.f32.mrf.mxu0
        %v690 = vadd.f32 %v618, %v689
        %v691 = vpop.f32.mrf.mxu0
        %v692 = vadd.f32 %v618, %v691
        %693 = vdwg.mxu0
        %v694 = vmax.f32 %v690, 0.0
        %v695 = vmax.f32 %v692, 0.0
        %696 = vrot.lane.b32.xlu0 %v522, 102
        %v697 = vpop.permute.xlu0 %696
        %698 = vrot.lane.b32.xlu0 %v523, 102
        %v699 = vpop.permute.xlu0 %698
        %v700 = vlaneseq
        %v701 = vand.u32 %v700, 127
        %vm702 = vcmp.lt.s32.totalorder %v701, 102
        %v703 = vsel %vm702, %v697, %v699
        %v704 = vsel %vm702, %v699, %v697
        %v705 = vld [vmem:[#allocation13] ss:$8 sm:$0x3]
        %v707 = vlaneseq
        %v708 = vshrl.u32 %v707, 7
        %v709 = vsub.s32 0, %v708
        %v710 = vrot.slane %v705, %v709
        %v711 = vlaneseq
        %v712 = vshrl.u32 %v711, 7
        %v713 = vsub.s32 1, %v712
        %v714 = vrot.slane %v705, %v713
        %v717 = vmul.f32 %v704, %v710
        %v718 = vmul.f32 %v703, %v714
        %719 = vrot.lane.b32.xlu0 %v522, 96
        %v720 = vpop.permute.xlu0 %719
        %721 = vrot.lane.b32.xlu0 %v523, 96
        %v722 = vpop.permute.xlu0 %721
        %vm723 = vcmp.lt.s32.totalorder %v701, 96
        %v724 = vsel %vm723, %v720, %v722
        %v725 = vsel %vm723, %v722, %v720
        %s726 = scalar_lea.vmem [#allocation13], 1
        %v727 = vld [vmem:[%s726] ss:$8 sm:$0x3]
        %v729 = vlaneseq
        %v730 = vshrl.u32 %v729, 7
        %v731 = vsub.s32 0, %v730
        %v732 = vrot.slane %v727, %v731
        %v733 = vlaneseq
        %v734 = vshrl.u32 %v733, 7
        %v735 = vsub.s32 1, %v734
        %v736 = vrot.slane %v727, %v735
        %v739 = vmul.f32 %v725, %v732
        %v740 = vmul.f32 %v724, %v736
        %741 = vrot.lane.b32.xlu0 %v522, 90
        %v742 = vpop.permute.xlu0 %741
        %743 = vrot.lane.b32.xlu0 %v523, 90
        %v744 = vpop.permute.xlu0 %743
        %vm745 = vcmp.lt.s32.totalorder %v701, 90
        %v746 = vsel %vm745, %v742, %v744
        %v747 = vsel %vm745, %v744, %v742
        %s748 = scalar_lea.vmem [#allocation13], 2
        %v749 = vld [vmem:[%s748] ss:$8 sm:$0x3]
        %v751 = vlaneseq
        %v752 = vshrl.u32 %v751, 7
        %v753 = vsub.s32 0, %v752
        %v754 = vrot.slane %v749, %v753
        %v755 = vlaneseq
        %v756 = vshrl.u32 %v755, 7
        %v757 = vsub.s32 1, %v756
        %v758 = vrot.slane %v749, %v757
        %v761 = vmul.f32 %v747, %v754
        %v762 = vmul.f32 %v746, %v758
        %763 = vrot.lane.b32.xlu0 %v522, 6
        %v764 = vpop.permute.xlu0 %763
        %765 = vrot.lane.b32.xlu0 %v523, 6
        %v766 = vpop.permute.xlu0 %765
        %vm767 = vcmp.lt.s32.totalorder %v701, 6
        %v768 = vsel %vm767, %v764, %v766
        %v769 = vsel %vm767, %v766, %v764
        %s770 = scalar_lea.vmem [#allocation13], 3
        %v771 = vld [vmem:[%s770] ss:$8 sm:$0x3]
        %v773 = vlaneseq
        %v774 = vshrl.u32 %v773, 7
        %v775 = vsub.s32 0, %v774
        %v776 = vrot.slane %v771, %v775
        %v777 = vlaneseq
        %v778 = vshrl.u32 %v777, 7
        %v779 = vsub.s32 1, %v778
        %v780 = vrot.slane %v771, %v779
        %v783 = vmul.f32 %v769, %v776
        %v784 = vmul.f32 %v768, %v780
        %785 = vrot.lane.b32.xlu0 %v522, 122
        %v786 = vpop.permute.xlu0 %785
        %787 = vrot.lane.b32.xlu0 %v523, 122
        %v788 = vpop.permute.xlu0 %787
        %vm789 = vcmp.lt.s32.totalorder %v701, 122
        %v790 = vsel %vm789, %v786, %v788
        %v791 = vsel %vm789, %v788, %v786
        %s792 = scalar_lea.vmem [#allocation13], 4
        %v793 = vld [vmem:[%s792] ss:$8 sm:$0x3]
        %v795 = vlaneseq
        %v796 = vshrl.u32 %v795, 7
        %v797 = vsub.s32 0, %v796
        %v798 = vrot.slane %v793, %v797
        %v799 = vlaneseq
        %v800 = vshrl.u32 %v799, 7
        %v801 = vsub.s32 1, %v800
        %v802 = vrot.slane %v793, %v801
        %v805 = vmul.f32 %v790, %v798
        %v806 = vmul.f32 %v791, %v802
        %807 = vrot.lane.b32.xlu0 %v522, 38
        %v808 = vpop.permute.xlu0 %807
        %809 = vrot.lane.b32.xlu0 %v523, 38
        %v810 = vpop.permute.xlu0 %809
        %vm811 = vcmp.lt.s32.totalorder %v701, 38
        %v812 = vsel %vm811, %v808, %v810
        %v813 = vsel %vm811, %v810, %v808
        %s814 = scalar_lea.vmem [#allocation13], 5
        %v815 = vld [vmem:[%s814] ss:$8 sm:$0x3]
        %v817 = vlaneseq
        %v818 = vshrl.u32 %v817, 7
        %v819 = vsub.s32 0, %v818
        %v820 = vrot.slane %v815, %v819
        %v821 = vlaneseq
        %v822 = vshrl.u32 %v821, 7
        %v823 = vsub.s32 1, %v822
        %v824 = vrot.slane %v815, %v823
        %v827 = vmul.f32 %v812, %v820
        %v828 = vmul.f32 %v813, %v824
        %829 = vrot.lane.b32.xlu0 %v522, 32
        %v830 = vpop.permute.xlu0 %829
        %831 = vrot.lane.b32.xlu0 %v523, 32
        %v832 = vpop.permute.xlu0 %831
        %vm833 = vcmp.lt.s32.totalorder %v701, 32
        %v834 = vsel %vm833, %v830, %v832
        %v835 = vsel %vm833, %v832, %v830
        %s836 = scalar_lea.vmem [#allocation13], 6
        %v837 = vld [vmem:[%s836] ss:$8 sm:$0x3]
        %v839 = vlaneseq
        %v840 = vshrl.u32 %v839, 7
        %v841 = vsub.s32 0, %v840
        %v842 = vrot.slane %v837, %v841
        %v843 = vlaneseq
        %v844 = vshrl.u32 %v843, 7
        %v845 = vsub.s32 1, %v844
        %v846 = vrot.slane %v837, %v845
        %v849 = vmul.f32 %v834, %v842
        %v850 = vmul.f32 %v835, %v846
        %851 = vrot.lane.b32.xlu0 %v522, 26
        %v852 = vpop.permute.xlu0 %851
        %853 = vrot.lane.b32.xlu0 %v523, 26
        %v854 = vpop.permute.xlu0 %853
        %vm855 = vcmp.lt.s32.totalorder %v701, 26
        %v856 = vsel %vm855, %v852, %v854
        %v857 = vsel %vm855, %v854, %v852
        %s858 = scalar_lea.vmem [#allocation13], 7
        %v859 = vld [vmem:[%s858] ss:$8 sm:$0x3]
        %v861 = vlaneseq
        %v862 = vshrl.u32 %v861, 7
        %v863 = vsub.s32 0, %v862
        %v864 = vrot.slane %v859, %v863
        %v865 = vlaneseq
        %v866 = vshrl.u32 %v865, 7
        %v867 = vsub.s32 1, %v866
        %v868 = vrot.slane %v859, %v867
        %v871 = vmul.f32 %v856, %v864
        %v872 = vmul.f32 %v857, %v868
        %v873 = vld [vmem:[#allocation8] sm:$0xff]
        %v874 = vld [vmem:[%s8] sm:$0xff]
        %v875 = vld [vmem:[%s8 + $0x8] sm:$0xff]
        %vm876 = vcmask 588800
        %v878 = vsel %vm876, %v873, 0
        %880 = vmatprep.subr.mxu0 0.0
        %881 = vmatpush1.msra.mxu0 0.0
        %882 = vmatprep.subr.mxu0 0.0
        %883 = vmatpush1.msra.mxu0 0.0
        %884 = vmatprep.subr.mxu0 0.0
        %885 = vmatpush1.msra.mxu0 0.0
        %886 = vmatprep.subr.mxu0 0.0
        %887 = vmatpush1.msra.mxu0 0.0
        %888 = vmatprep.subr.mxu0 0.0
        %889 = vmatpush1.msra.mxu0 0.0
        %890 = vmatprep.subr.mxu0 0.0
        %891 = vmatpush1.msra.mxu0 0.0
        %892 = vmatprep.subr.mxu0 0.0
        %893 = vmatpush1.msra.mxu0 0.0
        %894 = vmatprep.subr.mxu0 %v872
        %895 = vmatpush1.msra.mxu0 %v871
        %896 = vmatprep.subr.mxu0 %v850
        %897 = vmatpush1.msra.mxu0 %v849
        %898 = vmatprep.subr.mxu0 %v828
        %899 = vmatpush1.msra.mxu0 %v827
        %900 = vmatprep.subr.mxu0 %v806
        %901 = vmatpush1.msra.mxu0 %v805
        %902 = vmatprep.subr.mxu0 %v523
        %903 = vmatpush1.msra.mxu0 %v522
        %904 = vmatprep.subr.mxu0 %v784
        %905 = vmatpush1.msra.mxu0 %v783
        %906 = vmatprep.subr.mxu0 %v762
        %907 = vmatpush1.msra.mxu0 %v761
        %908 = vmatprep.subr.mxu0 %v740
        %909 = vmatpush1.msra.mxu0 %v739
        %910 = vmatprep.subr.mxu0 %v718
        %911 = vmatpush1.msra.mxu0 %v717
        %912 = vmatprep.subr.mxu0 0.0
        %913 = vmatpush2.msra.mxu0 0.0
        %914 = vmatprep.subr.mxu0 0.0
        %915 = vmatpush2.msra.mxu0 0.0
        %916 = vmatprep.subr.mxu0 0.0
        %917 = vmatpush2.msra.mxu0 0.0
        %918 = vmatprep.subr.mxu0 0.0
        %919 = vmatpush2.msra.mxu0 0.0
        %920 = vmatprep.subr.mxu0 0.0
        %921 = vmatpush2.msra.mxu0 0.0
        %922 = vmatprep.subr.mxu0 0.0
        %923 = vmatpush2.msra.mxu0 0.0
        %924 = vmatprep.subr.mxu0 0.0
        %925 = vmatpush2.msra.mxu0 0.0
        %926 = vmatprep.subr.mxu0 0.0
        %927 = vmatpush2.msra.mxu0 0.0
        %928 = vmatprep.subr.mxu0 0.0
        %929 = vmatpush2.msra.mxu0 0.0
        %930 = vmatprep.subr.mxu0 0.0
        %931 = vmatpush2.msra.mxu0 0.0
        %932 = vmatprep.subr.mxu0 0.0
        %933 = vmatpush2.msra.mxu0 0.0
        %934 = vmatprep.subr.mxu0 0.0
        %935 = vmatpush2.msra.mxu0 0.0
        %936 = vmatprep.subr.mxu0 0.0
        %937 = vmatpush2.msra.mxu0 0.0
        %938 = vmatprep.subr.mxu0 0.0
        %939 = vmatpush2.msra.mxu0 0.0
        %940 = vmatprep.subr.mxu0 0.0
        %941 = vmatpush2.msra.mxu0 0.0
        %942 = vmatprep.subr.mxu0 0.0
        %943 = vmatpush2.msra.mxu0 0.0
        %944 = vmatprep.mubr.f32.mxu0 0.0
        %945 = vmatmul.mubr.f32.gmra.mxu0 %v878
        %v946 = vpop.f32.mrf.mxu0
        %v947 = vadd.f32 %v874, %v946
        %v948 = vpop.f32.mrf.mxu0
        %v949 = vadd.f32 %v875, %v948
        %950 = vdwg.mxu0
        %v951 = vmax.f32 %v947, 0.0
        %v952 = vmax.f32 %v949, 0.0
        %953 = vrot.lane.b32.xlu0 %v522, 76
        %v954 = vpop.permute.xlu0 %953
        %955 = vrot.lane.b32.xlu0 %v523, 76
        %v956 = vpop.permute.xlu0 %955
        %vm957 = vcmp.lt.s32.totalorder %v701, 76
        %v958 = vsel %vm957, %v954, %v956
        %v959 = vsel %vm957, %v956, %v954
        %s960 = scalar_lea.vmem [#allocation13], 16
        %v961 = vld [vmem:[%s960] ss:$8 sm:$0x3]
        %v963 = vlaneseq
        %v964 = vshrl.u32 %v963, 7
        %v965 = vsub.s32 0, %v964
        %v966 = vrot.slane %v961, %v965
        %v967 = vlaneseq
        %v968 = vshrl.u32 %v967, 7
        %v969 = vsub.s32 1, %v968
        %v970 = vrot.slane %v961, %v969
        %v973 = vmul.f32 %v958, %v966
        %v974 = vmul.f32 %v959, %v970
        %975 = vrot.lane.b32.xlu0 %v522, 64
        %v976 = vpop.permute.xlu0 %975
        %977 = vrot.lane.b32.xlu0 %v523, 64
        %v978 = vpop.permute.xlu0 %977
        %vm979 = vcmp.lt.s32.totalorder %v701, 64
        %v980 = vsel %vm979, %v976, %v978
        %v981 = vsel %vm979, %v978, %v976
        %s982 = scalar_lea.vmem [#allocation13], 17
        %v983 = vld [vmem:[%s982] ss:$8 sm:$0x3]
        %v985 = vlaneseq
        %v986 = vshrl.u32 %v985, 7
        %v987 = vsub.s32 0, %v986
        %v988 = vrot.slane %v983, %v987
        %v989 = vlaneseq
        %v990 = vshrl.u32 %v989, 7
        %v991 = vsub.s32 1, %v990
        %v992 = vrot.slane %v983, %v991
        %v995 = vmul.f32 %v980, %v988
        %v996 = vmul.f32 %v981, %v992
        %997 = vrot.lane.b32.xlu0 %v522, 52
        %v998 = vpop.permute.xlu0 %997
        %999 = vrot.lane.b32.xlu0 %v523, 52
        %v1000 = vpop.permute.xlu0 %999
        %vm1001 = vcmp.lt.s32.totalorder %v701, 52
        %v1002 = vsel %vm1001, %v998, %v1000
        %v1003 = vsel %vm1001, %v1000, %v998
        %s1004 = scalar_lea.vmem [#allocation13], 18
        %v1005 = vld [vmem:[%s1004] ss:$8 sm:$0x3]
        %v1007 = vlaneseq
        %v1008 = vshrl.u32 %v1007, 7
        %v1009 = vsub.s32 0, %v1008
        %v1010 = vrot.slane %v1005, %v1009
        %v1011 = vlaneseq
        %v1012 = vshrl.u32 %v1011, 7
        %v1013 = vsub.s32 1, %v1012
        %v1014 = vrot.slane %v1005, %v1013
        %v1017 = vmul.f32 %v1002, %v1010
        %v1018 = vmul.f32 %v1003, %v1014
        %1019 = vrot.lane.b32.xlu0 %v522, 12
        %v1020 = vpop.permute.xlu0 %1019
        %1021 = vrot.lane.b32.xlu0 %v523, 12
        %v1022 = vpop.permute.xlu0 %1021
        %vm1023 = vcmp.lt.s32.totalorder %v701, 12
        %v1024 = vsel %vm1023, %v1020, %v1022
        %v1025 = vsel %vm1023, %v1022, %v1020
        %s1026 = scalar_lea.vmem [#allocation13], 19
        %v1027 = vld [vmem:[%s1026] ss:$8 sm:$0x3]
        %v1029 = vlaneseq
        %v1030 = vshrl.u32 %v1029, 7
        %v1031 = vsub.s32 0, %v1030
        %v1032 = vrot.slane %v1027, %v1031
        %v1033 = vlaneseq
        %v1034 = vshrl.u32 %v1033, 7
        %v1035 = vsub.s32 1, %v1034
        %v1036 = vrot.slane %v1027, %v1035
        %v1039 = vmul.f32 %v1025, %v1032
        %v1040 = vmul.f32 %v1024, %v1036
        %1041 = vrot.lane.b32.xlu0 %v522, 116
        %v1042 = vpop.permute.xlu0 %1041
        %1043 = vrot.lane.b32.xlu0 %v523, 116
        %v1044 = vpop.permute.xlu0 %1043
        %vm1045 = vcmp.lt.s32.totalorder %v701, 116
        %v1046 = vsel %vm1045, %v1042, %v1044
        %v1047 = vsel %vm1045, %v1044, %v1042
        %s1048 = scalar_lea.vmem [#allocation13], 20
        %v1049 = vld [vmem:[%s1048] ss:$8 sm:$0x3]
        %v1051 = vlaneseq
        %v1052 = vshrl.u32 %v1051, 7
        %v1053 = vsub.s32 0, %v1052
        %v1054 = vrot.slane %v1049, %v1053
        %v1055 = vlaneseq
        %v1056 = vshrl.u32 %v1055, 7
        %v1057 = vsub.s32 1, %v1056
        %v1058 = vrot.slane %v1049, %v1057
        %v1061 = vmul.f32 %v1046, %v1054
        %v1062 = vmul.f32 %v1047, %v1058
        %s1063 = scalar_lea.vmem [#allocation13], 21
        %v1064 = vld [vmem:[%s1063] ss:$8 sm:$0x3]
        %v1066 = vlaneseq
        %v1067 = vshrl.u32 %v1066, 7
        %v1068 = vsub.s32 0, %v1067
        %v1069 = vrot.slane %v1064, %v1068
        %v1070 = vlaneseq
        %v1071 = vshrl.u32 %v1070, 7
        %v1072 = vsub.s32 1, %v1071
        %v1073 = vrot.slane %v1064, %v1072
        %v1076 = vmul.f32 %v959, %v1069
        %v1077 = vmul.f32 %v958, %v1073
        %s1078 = scalar_lea.vmem [#allocation13], 22
        %v1079 = vld [vmem:[%s1078] ss:$8 sm:$0x3]
        %v1081 = vlaneseq
        %v1082 = vshrl.u32 %v1081, 7
        %v1083 = vsub.s32 0, %v1082
        %v1084 = vrot.slane %v1079, %v1083
        %v1085 = vlaneseq
        %v1086 = vshrl.u32 %v1085, 7
        %v1087 = vsub.s32 1, %v1086
        %v1088 = vrot.slane %v1079, %v1087
        %v1091 = vmul.f32 %v981, %v1084
        %v1092 = vmul.f32 %v980, %v1088
        %s1093 = scalar_lea.vmem [#allocation13], 23
        %v1094 = vld [vmem:[%s1093] ss:$8 sm:$0x3]
        %v1096 = vlaneseq
        %v1097 = vshrl.u32 %v1096, 7
        %v1098 = vsub.s32 0, %v1097
        %v1099 = vrot.slane %v1094, %v1098
        %v1100 = vlaneseq
        %v1101 = vshrl.u32 %v1100, 7
        %v1102 = vsub.s32 1, %v1101
        %v1103 = vrot.slane %v1094, %v1102
        %v1106 = vmul.f32 %v1003, %v1099
        %v1107 = vmul.f32 %v1002, %v1103
        %v1108 = vld [vmem:[#allocation10] sm:$0xff]
        %s1109 = scalar_lea.vmem %s8, 16
        %v1110 = vld [vmem:[%s1109] sm:$0xff]
        %v1111 = vld [vmem:[%s1109 + $0x8] sm:$0xff]
        %v1113 = vsel %vm876, %v1108, 0
        %1115 = vmatprep.subr.mxu0 0.0
        %1116 = vmatpush1.msra.mxu0 0.0
        %1117 = vmatprep.subr.mxu0 0.0
        %1118 = vmatpush1.msra.mxu0 0.0
        %1119 = vmatprep.subr.mxu0 0.0
        %1120 = vmatpush1.msra.mxu0 0.0
        %1121 = vmatprep.subr.mxu0 0.0
        %1122 = vmatpush1.msra.mxu0 0.0
        %1123 = vmatprep.subr.mxu0 0.0
        %1124 = vmatpush1.msra.mxu0 0.0
        %1125 = vmatprep.subr.mxu0 0.0
        %1126 = vmatpush1.msra.mxu0 0.0
        %1127 = vmatprep.subr.mxu0 0.0
        %1128 = vmatpush1.msra.mxu0 0.0
        %1129 = vmatprep.subr.mxu0 %v1107
        %1130 = vmatpush1.msra.mxu0 %v1106
        %1131 = vmatprep.subr.mxu0 %v1092
        %1132 = vmatpush1.msra.mxu0 %v1091
        %1133 = vmatprep.subr.mxu0 %v1077
        %1134 = vmatpush1.msra.mxu0 %v1076
        %1135 = vmatprep.subr.mxu0 %v1062
        %1136 = vmatpush1.msra.mxu0 %v1061
        %1137 = vmatprep.subr.mxu0 %v523
        %1138 = vmatpush1.msra.mxu0 %v522
        %1139 = vmatprep.subr.mxu0 %v1040
        %1140 = vmatpush1.msra.mxu0 %v1039
        %1141 = vmatprep.subr.mxu0 %v1018
        %1142 = vmatpush1.msra.mxu0 %v1017
        %1143 = vmatprep.subr.mxu0 %v996
        %1144 = vmatpush1.msra.mxu0 %v995
        %1145 = vmatprep.subr.mxu0 %v974
        %1146 = vmatpush1.msra.mxu0 %v973
        %1147 = vmatprep.subr.mxu0 0.0
        %1148 = vmatpush2.msra.mxu0 0.0
        %1149 = vmatprep.subr.mxu0 0.0
        %1150 = vmatpush2.msra.mxu0 0.0
        %1151 = vmatprep.subr.mxu0 0.0
        %1152 = vmatpush2.msra.mxu0 0.0
        %1153 = vmatprep.subr.mxu0 0.0
        %1154 = vmatpush2.msra.mxu0 0.0
        %1155 = vmatprep.subr.mxu0 0.0
        %1156 = vmatpush2.msra.mxu0 0.0
        %1157 = vmatprep.subr.mxu0 0.0
        %1158 = vmatpush2.msra.mxu0 0.0
        %1159 = vmatprep.subr.mxu0 0.0
        %1160 = vmatpush2.msra.mxu0 0.0
        %1161 = vmatprep.subr.mxu0 0.0
        %1162 = vmatpush2.msra.mxu0 0.0
        %1163 = vmatprep.subr.mxu0 0.0
        %1164 = vmatpush2.msra.mxu0 0.0
        %1165 = vmatprep.subr.mxu0 0.0
        %1166 = vmatpush2.msra.mxu0 0.0
        %1167 = vmatprep.subr.mxu0 0.0
        %1168 = vmatpush2.msra.mxu0 0.0
        %1169 = vmatprep.subr.mxu0 0.0
        %1170 = vmatpush2.msra.mxu0 0.0
        %1171 = vmatprep.subr.mxu0 0.0
        %1172 = vmatpush2.msra.mxu0 0.0
        %1173 = vmatprep.subr.mxu0 0.0
        %1174 = vmatpush2.msra.mxu0 0.0
        %1175 = vmatprep.subr.mxu0 0.0
        %1176 = vmatpush2.msra.mxu0 0.0
        %1177 = vmatprep.subr.mxu0 0.0
        %1178 = vmatpush2.msra.mxu0 0.0
        %1179 = vmatprep.mubr.f32.mxu0 0.0
        %1180 = vmatmul.mubr.f32.gmra.mxu0 %v1113
        %v1181 = vpop.f32.mrf.mxu0
        %v1182 = vadd.f32 %v1110, %v1181
        %v1183 = vpop.f32.mrf.mxu0
        %v1184 = vadd.f32 %v1111, %v1183
        %1185 = vdwg.mxu0
        %v1186 = vmax.f32 %v1182, 0.0
        %v1187 = vmax.f32 %v1184, 0.0
        %v1188 = vld [vmem:[#allocation11] sm:$0xff]
        %s1189 = scalar_lea.vmem %s8, 32
        %v1190 = vld [vmem:[%s1189] sm:$0xff]
        %v1191 = vld [vmem:[%s1189 + $0x8] sm:$0xff]
        %v1193 = vsel %vm536, %v1188, 0
        %1195 = vmatprep.subr.mxu0 0.0
        %1196 = vmatpush1.msra.mxu0 0.0
        %1197 = vmatprep.subr.mxu0 0.0
        %1198 = vmatpush1.msra.mxu0 0.0
        %1199 = vmatprep.subr.mxu0 0.0
        %1200 = vmatpush1.msra.mxu0 0.0
        %1201 = vmatprep.subr.mxu0 0.0
        %1202 = vmatpush1.msra.mxu0 0.0
        %1203 = vmatprep.subr.mxu0 0.0
        %1204 = vmatpush1.msra.mxu0 0.0
        %1205 = vmatprep.subr.mxu0 0.0
        %1206 = vmatpush1.msra.mxu0 0.0
        %1207 = vmatprep.subr.mxu0 0.0
        %1208 = vmatpush1.msra.mxu0 0.0
        %1209 = vmatprep.subr.mxu0 0.0
        %1210 = vmatpush1.msra.mxu0 0.0
        %1211 = vmatprep.subr.mxu0 0.0
        %1212 = vmatpush1.msra.mxu0 0.0
        %1213 = vmatprep.subr.mxu0 0.0
        %1214 = vmatpush1.msra.mxu0 0.0
        %1215 = vmatprep.subr.mxu0 0.0
        %1216 = vmatpush1.msra.mxu0 0.0
        %1217 = vmatprep.subr.mxu0 0.0
        %1218 = vmatpush1.msra.mxu0 0.0
        %1219 = vmatprep.subr.mxu0 0.0
        %1220 = vmatpush1.msra.mxu0 0.0
        %1221 = vmatprep.subr.mxu0 0.0
        %1222 = vmatpush1.msra.mxu0 0.0
        %1223 = vmatprep.subr.mxu0 0.0
        %1224 = vmatpush1.msra.mxu0 0.0
        %1225 = vmatprep.subr.mxu0 %v523
        %1226 = vmatpush1.msra.mxu0 %v522
        %1227 = vmatprep.subr.mxu0 0.0
        %1228 = vmatpush2.msra.mxu0 0.0
        %1229 = vmatprep.subr.mxu0 0.0
        %1230 = vmatpush2.msra.mxu0 0.0
        %1231 = vmatprep.subr.mxu0 0.0
        %1232 = vmatpush2.msra.mxu0 0.0
        %1233 = vmatprep.subr.mxu0 0.0
        %1234 = vmatpush2.msra.mxu0 0.0
        %1235 = vmatprep.subr.mxu0 0.0
        %1236 = vmatpush2.msra.mxu0 0.0
        %1237 = vmatprep.subr.mxu0 0.0
        %1238 = vmatpush2.msra.mxu0 0.0
        %1239 = vmatprep.subr.mxu0 0.0
        %1240 = vmatpush2.msra.mxu0 0.0
        %1241 = vmatprep.subr.mxu0 0.0
        %1242 = vmatpush2.msra.mxu0 0.0
        %1243 = vmatprep.subr.mxu0 0.0
        %1244 = vmatpush2.msra.mxu0 0.0
        %1245 = vmatprep.subr.mxu0 0.0
        %1246 = vmatpush2.msra.mxu0 0.0
        %1247 = vmatprep.subr.mxu0 0.0
        %1248 = vmatpush2.msra.mxu0 0.0
        %1249 = vmatprep.subr.mxu0 0.0
        %1250 = vmatpush2.msra.mxu0 0.0
        %1251 = vmatprep.subr.mxu0 0.0
        %1252 = vmatpush2.msra.mxu0 0.0
        %1253 = vmatprep.subr.mxu0 0.0
        %1254 = vmatpush2.msra.mxu0 0.0
        %1255 = vmatprep.subr.mxu0 0.0
        %1256 = vmatpush2.msra.mxu0 0.0
        %1257 = vmatprep.subr.mxu0 0.0
        %1258 = vmatpush2.msra.mxu0 0.0
        %1259 = vmatprep.mubr.f32.mxu0 0.0
        %1260 = vmatmul.mubr.f32.gmra.mxu0 %v1193
        %v1261 = vpop.f32.mrf.mxu0
        %v1262 = vadd.f32 %v1190, %v1261
        %v1263 = vpop.f32.mrf.mxu0
        %v1264 = vadd.f32 %v1191, %v1263
        %1265 = vdwg.mxu0
        %v1266 = vmax.f32 %v1262, 0.0
        %v1267 = vmax.f32 %v1264, 0.0
        %v1268 = vld [vmem:[#allocation14] sm:$0xff]
        %v1269 = vld [vmem:[#allocation14 + $0x8] sm:$0xff]
        %v1270 = vld [vmem:[%s11] sm:$0xff]
        %v1271 = vld [vmem:[%s11 + $0x8] sm:$0xff]
        %1273 = vset.pattern.permute.xlu0 0
        %1274 = vperm.xlu0 %1273, %v1270
        %v1275 = vpop.permute.xlu0 %1274
        %1278 = vset.pattern.permute.xlu0 0
        %1279 = vperm.xlu0 %1278, %v1271
        %v1280 = vpop.permute.xlu0 %1279
        %vm1282 = vcmask 326656
        %v1284 = vsel %vm1282, %v1268, 0
        %v1287 = vsel %vm1282, %v1269, 0
        %1289 = vmatprep.subr.mxu0 0.0
        %1290 = vmatpush1.msra.mxu0 0.0
        %1291 = vmatprep.subr.mxu0 0.0
        %1292 = vmatpush1.msra.mxu0 0.0
        %1293 = vmatprep.subr.mxu0 0.0
        %1294 = vmatpush1.msra.mxu0 0.0
        %1295 = vmatprep.subr.mxu0 0.0
        %1296 = vmatpush1.msra.mxu0 0.0
        %1297 = vmatprep.subr.mxu0 0.0
        %1298 = vmatpush1.msra.mxu0 0.0
        %1299 = vmatprep.subr.mxu0 0.0
        %1300 = vmatpush1.msra.mxu0 0.0
        %1301 = vmatprep.subr.mxu0 0.0
        %1302 = vmatpush1.msra.mxu0 0.0
        %1303 = vmatprep.subr.mxu0 0.0
        %1304 = vmatpush1.msra.mxu0 0.0
        %1305 = vmatprep.subr.mxu0 0.0
        %1306 = vmatpush1.msra.mxu0 0.0
        %1307 = vmatprep.subr.mxu0 0.0
        %1308 = vmatpush1.msra.mxu0 0.0
        %1309 = vmatprep.subr.mxu0 0.0
        %1310 = vmatpush1.msra.mxu0 0.0
        %1311 = vmatprep.subr.mxu0 %v1267
        %1312 = vmatpush1.msra.mxu0 %v1266
        %1313 = vmatprep.subr.mxu0 %v1187
        %1314 = vmatpush1.msra.mxu0 %v1186
        %1315 = vmatprep.subr.mxu0 %v952
        %1316 = vmatpush1.msra.mxu0 %v951
        %1317 = vmatprep.subr.mxu0 %v695
        %1318 = vmatpush1.msra.mxu0 %v694
        %1319 = vmatprep.subr.mxu0 %v612
        %1320 = vmatpush1.msra.mxu0 %v611
        %1321 = vmatprep.subr.mxu0 0.0
        %1322 = vmatpush2.msra.mxu0 0.0
        %1323 = vmatprep.subr.mxu0 0.0
        %1324 = vmatpush2.msra.mxu0 0.0
        %1325 = vmatprep.subr.mxu0 0.0
        %1326 = vmatpush2.msra.mxu0 0.0
        %1327 = vmatprep.subr.mxu0 0.0
        %1328 = vmatpush2.msra.mxu0 0.0
        %1329 = vmatprep.subr.mxu0 0.0
        %1330 = vmatpush2.msra.mxu0 0.0
        %1331 = vmatprep.subr.mxu0 0.0
        %1332 = vmatpush2.msra.mxu0 0.0
        %1333 = vmatprep.subr.mxu0 0.0
        %1334 = vmatpush2.msra.mxu0 0.0
        %1335 = vmatprep.subr.mxu0 0.0
        %1336 = vmatpush2.msra.mxu0 0.0
        %1337 = vmatprep.subr.mxu0 0.0
        %1338 = vmatpush2.msra.mxu0 0.0
        %1339 = vmatprep.subr.mxu0 0.0
        %1340 = vmatpush2.msra.mxu0 0.0
        %1341 = vmatprep.subr.mxu0 0.0
        %1342 = vmatpush2.msra.mxu0 0.0
        %1343 = vmatprep.subr.mxu0 0.0
        %1344 = vmatpush2.msra.mxu0 0.0
        %1345 = vmatprep.subr.mxu0 0.0
        %1346 = vmatpush2.msra.mxu0 0.0
        %1347 = vmatprep.subr.mxu0 0.0
        %1348 = vmatpush2.msra.mxu0 0.0
        %1349 = vmatprep.subr.mxu0 0.0
        %1350 = vmatpush2.msra.mxu0 0.0
        %1351 = vmatprep.subr.mxu0 0.0
        %1352 = vmatpush2.msra.mxu0 0.0
        %1353 = vmatprep.mubr.f32.mxu0 0.0
        %1354 = vmatmul.mubr.f32.gmra.mxu0 %v1284
        %v1355 = vpop.f32.mrf.mxu0
        %v1356 = vadd.f32 %v1275, %v1355
        %v1357 = vpop.f32.mrf.mxu0
        %v1358 = vadd.f32 %v1275, %v1357
        %1359 = vmatprep.mubr.f32.mxu0 0.0
        %1360 = vmatmul.mubr.f32.gmra.mxu0 %v1287
        %v1361 = vpop.f32.mrf.mxu0
        %v1362 = vadd.f32 %v1280, %v1361
        %v1363 = vpop.f32.mrf.mxu0
        %v1364 = vadd.f32 %v1280, %v1363
        %1365 = vdwg.mxu0
        %1366 = vst [vmem:[%s521] sm:$0xff] %v1356
        %1367 = vst [vmem:[%s521 + $0x8] sm:$0xff] %v1358
        %1368 = vst [vmem:[%s521 + $0x10] sm:$0xff] %v1362
        %1369 = vst [vmem:[%s521 + $0x18] sm:$0xff] %v1364
        %s1370 = sand.u32 %s298, 1
        %s1371 = scalar_lea.sflag [#allocation4], %s1370
        %s1372 = sand.u32 %s298, 1
        %s1373 = smul.addr %s1372, 32
        %s1374 = scalar_lea.vmem [#allocation16], %s1373
        // Predicated region
        $region101: #{tpu_custom_call.1} parent=67 // pred_check
          %p1375 = pneg %p308
        $region102: #{tpu_custom_call.1} parent=67 // pred_check_branch
          %1377 = sbr.rel (%p1375) target = $region104
        $region103: #{tpu_custom_call.1} parent=67 // pred_region
          %s1379 = ssub.s32 512, 512
          %1380 = vsyncadd %s1371, %s1379
          %s1381 = smul.addr %s33, 4
          %s1382 = smul.addr %s1381, 128
          %s1383 = scalar_lea.hbm %s12, %s1382
          %s1384 = sshll.u32 %s1374, 4
          %s1385 = int_to_ptr.vmem [resolvable:$true] %s1384
          %1390 = dma.vmem_to_hbm [thread:$0]  %s1385, 512, %s1383, %s1371, 256, 256, 16
        $region104: #{tpu_custom_call.1} parent=67 // pred_fallthru
          _
      $region68: #{tpu_custom_call.1} parent=5 // pred_fallthru
        _
      %p1391 = scmp.le.s32.totalorder 2, %s28
      // Predicated region
      $region105: #{tpu_custom_call.1} parent=5 // pred_check
        %p1392 = pneg %p1391
      $region106: #{tpu_custom_call.1} parent=5 // pred_check_branch
        %1394 = sbr.rel (%p1392) target = $region108
      $region107: #{tpu_custom_call.1} parent=5 // pred_region
        %s1395 = ssub.s32 %s28, 2
        // Predicated region
        $region109: #{tpu_custom_call.1} parent=107 // pred_check
          %p1396 = pneg %p314
        $region110: #{tpu_custom_call.1} parent=107 // pred_check_branch
          %1398 = sbr.rel (%p1396) target = $region112
        $region111: #{tpu_custom_call.1} parent=107 // pred_region
          %s1399 = sand.u32 %s299, 1
          %s1400 = scalar_lea.sflag [#allocation4], %s1399
          %s1401 = sand.u32 %s299, 1
          %s1402 = smul.addr %s1401, 32
          %s1403 = scalar_lea.vmem [#allocation16], %s1402
          %1404 = dma.done %s1400, 512
        $region112: #{tpu_custom_call.1} parent=107 // pred_fallthru
          _
      $region108: #{tpu_custom_call.1} parent=5 // pred_fallthru
        _
    $region6: #{tpu_custom_call.1} parent=1 // loop_footer
      %s32 = sadd.s32 1, %s28
    $region7: #{tpu_custom_call.1} parent=1 // loop_footer_branch
      %27 = sbr.rel target = $region3
    $region8: #{tpu_custom_call.1} parent=1 // loop_exit
      _
    %1405 = vsyncpa [#allocation3], 1
    %s1406 = scalar_lea.sflag [#allocation3], 1
    %1407 = vsyncpa %s1406, 1
    %1408 = vsyncpa [#allocation6], 1
    %1409 = vsyncpa [#allocation9], 1
    %1410 = vsyncpa [#allocation12], 1
    %1411 = vsyncpa [#allocation15], 1
    %1412 = vsyncpa [#allocation4], 1
    %s1413 = scalar_lea.sflag [#allocation4], 1
    %1414 = vsyncpa %s1413, 1

</llo_original>
